<compile_context>
chip_gen: v5e
topology: v5e:2x2
jax: 0.10.0
libtpu: 0.0.40
codegen_flags: <defaults>
</compile_context>

<pallas_src>
import jax
import jax.numpy as jnp
from jax.experimental import pallas as pl
from jax.experimental.pallas import tpu as pltpu


D_IN, D_H1, D_H2, D_H3, D_OUT = 784, 128, 96, 32, 10
PAD = 128            # lane-dense width used for all hidden / logit slabs
NEG_INF = -1.0e30    # bias fill for padded logit columns (ignored by LSE)


def _round_up(n, m):
    return ((n + m - 1) // m) * m


def mlp_kernel(x_ref, w1_ref, b1_ref, w2_ref, b2_ref,
               w3_ref, b3_ref, w4_ref, b4_ref, o_ref):
    wdt = w1_ref.dtype  # matmul-input dtype (f32 or bf16); accumulation is f32

    # Layer 1: Linear(784, 128) + ReLU
    h = jnp.dot(x_ref[...], w1_ref[...], preferred_element_type=jnp.float32)
    h = jnp.maximum(h + b1_ref[...], 0.0).astype(wdt)
    # Layer 2: Linear(128, 96 -> 128 padded) + ReLU (padded cols stay 0)
    h = jnp.dot(h, w2_ref[...], preferred_element_type=jnp.float32)
    h = jnp.maximum(h + b2_ref[...], 0.0).astype(wdt)
    # Layer 3: Linear(96, 32 -> 128 padded) + ReLU  (padded cols stay 0)
    h = jnp.dot(h, w3_ref[...], preferred_element_type=jnp.float32)
    h = jnp.maximum(h + b3_ref[...], 0.0).astype(wdt)
    # Layer 4: Linear(32, 10 -> 128 padded) + LogSoftmax (padded bias = -1e30
    # so padded columns contribute nothing to the log-sum-exp).
    logits = jnp.dot(h, w4_ref[...], preferred_element_type=jnp.float32)
    logits = logits + b4_ref[...]
    m = jnp.max(logits, axis=-1, keepdims=True)
    shifted = logits - m
    lse = jnp.log(jnp.sum(jnp.exp(shifted), axis=-1, keepdims=True))
    # Only the 10 real classes are written back (narrow, cheap writeback).
    o_ref[...] = (shifted - lse)[:, :D_OUT].astype(o_ref.dtype)


def _pack_params(params, compute_dtype):
    """Zero-pad hidden/output widths to 128 lanes; cast weights to compute_dtype.

    Biases stay f32.  Padded logit columns of layer 4 get bias -1e30 so the
    log-sum-exp ignores them; padded ReLU-layer columns get bias 0 (and zero
    downstream weight rows) so they contribute nothing.
    """
    w1, b1, w2, b2, w3, b3, w4, b4 = params

    def pad_w(w, rows, cols):
        r, c = w.shape
        return jnp.pad(w, ((0, rows - r), (0, cols - c))).astype(compute_dtype)

    def pad_b(b, cols, fill=0.0):
        b = jnp.asarray(b, jnp.float32).reshape(1, -1)
        return jnp.pad(b, ((0, 0), (0, cols - b.shape[1])),
                       constant_values=fill)

    return (
        pad_w(w1, D_IN, PAD), pad_b(b1, PAD),
        pad_w(w2, PAD, PAD), pad_b(b2, PAD),
        pad_w(w3, PAD, PAD), pad_b(b3, PAD),
        pad_w(w4, PAD, PAD), pad_b(b4, PAD, fill=NEG_INF),
    )


def mlp_forward(x, params, *, batch_tile=None, compute_dtype=jnp.bfloat16):
    """Fused MLP forward.  x: (B, 784) f32.  Returns (B, 10) f32 log-probs."""
    B = x.shape[0]
    itemsize = jnp.dtype(compute_dtype).itemsize
    if batch_tile is None:
        batch_tile = 2048 if itemsize <= 2 else 1024
    assert batch_tile % 8 == 0, "batch_tile must be a multiple of 8 (f32 sublanes)"

    # --- tiling: balanced tiles, >=2 (even) steps for v7x megacore sharding ---
    n_steps = pl.cdiv(B, batch_tile)
    if B >= 16:
        n_steps = max(n_steps, 2)
    if n_steps > 1 and n_steps % 2:
        n_steps += 1
    tile = _round_up(pl.cdiv(B, n_steps), 8)

    packed = _pack_params(params, compute_dtype)
    param_bytes = sum(int(p.size) * p.dtype.itemsize for p in packed)

    # --- generation-aware VMEM budget ---
    try:
        vmem_cap = int(pltpu.get_tpu_info().vmem_capacity_bytes)
    except Exception:
        vmem_cap = 64 << 20  # v7x per-TC size: safest assumption
    vmem_ceiling = max(min(vmem_cap * 3 // 4, vmem_cap - (16 << 20)), 8 << 20)

    def vmem_estimate(t):
        return (2 * t * D_IN * itemsize      # x blocks (double-buffered)
                + 2 * t * PAD * 4            # out blocks (lane-padded in VMEM)
                + 2 * param_bytes            # weights / biases (worst case 2x)
                + (4 << 20))                 # intermediates / slack

    while tile > 8 and vmem_estimate(tile) > vmem_ceiling:
        tile = _round_up(max(tile // 2, 8), 8)

    B_pad = _round_up(B, tile)
    grid = (B_pad // tile,)

    x_p = x.astype(compute_dtype)
    if B_pad != B:
        x_p = jnp.pad(x_p, ((0, B_pad - B), (0, 0)))

    # --- cost estimate (padded problem) ---
    flops = 2 * B_pad * (D_IN * PAD + 3 * PAD * PAD)
    bytes_accessed = (B_pad * D_IN * itemsize + param_bytes + B_pad * D_OUT * 4)
    cost = pl.CostEstimate(flops=flops, transcendentals=B_pad * (PAD + 1),
                           bytes_accessed=bytes_accessed)

    compiler_kwargs = dict(dimension_semantics=("parallel",))
    vmem_est = vmem_estimate(tile)
    if vmem_est > (12 << 20):  # above the smallest (v5e) scoped default
        compiler_kwargs["vmem_limit_bytes"] = int(
            min(max(int(1.5 * vmem_est), 16 << 20), vmem_ceiling))

    w1p, b1p, w2p, b2p, w3p, b3p, w4p, b4p = packed

    def build(single_buffer_params):
        pm = pl.Buffered(1) if single_buffer_params else None
        const2d = lambda shape: pl.BlockSpec(shape, lambda i: (0, 0),
                                             pipeline_mode=pm)
        return pl.pallas_call(
            mlp_kernel,
            out_shape=jax.ShapeDtypeStruct((B_pad, D_OUT), jnp.float32),
            grid=grid,
            in_specs=[
                pl.BlockSpec((tile, D_IN), lambda i: (i, 0)),   # x
                const2d((D_IN, PAD)), const2d((1, PAD)),        # W1, b1
                const2d((PAD, PAD)),  const2d((1, PAD)),        # W2, b2
                const2d((PAD, PAD)),  const2d((1, PAD)),        # W3, b3
                const2d((PAD, PAD)),  const2d((1, PAD)),        # W4, b4
            ],
            out_specs=pl.BlockSpec((tile, D_OUT), lambda i: (i, 0)),
            compiler_params=pltpu.CompilerParams(**compiler_kwargs),
            cost_estimate=cost,
        )

    args = (x_p, w1p, b1p, w2p, b2p, w3p, b3p, w4p, b4p)
    try:
        out = build(True)(*args)    # single-buffered constant params
    except Exception:
        out = build(False)(*args)   # fallback: default (double) buffering

    return out if B_pad == B else out[:B]


def init_params(key):
    """nn.Linear-style U(-1/sqrt(fan_in), 1/sqrt(fan_in)) init (unpadded shapes)."""
    dims = [(D_IN, D_H1), (D_H1, D_H2), (D_H2, D_H3), (D_H3, D_OUT)]
    params = []
    for fan_in, fan_out in dims:
        key, kw, kb = jax.random.split(key, 3)
        bound = 1.0 / jnp.sqrt(float(fan_in))
        w = jax.random.uniform(kw, (fan_in, fan_out), jnp.float32, -bound, bound)
        b = jax.random.uniform(kb, (1, fan_out), jnp.float32, -bound, bound)
        params += [w, b]
    return tuple(params)


def reference_forward(x, params):
    """Plain-JAX f32 reference for correctness checking."""
    w1, b1, w2, b2, w3, b3, w4, b4 = params
    h = jnp.maximum(x @ w1 + b1, 0.0)
    h = jnp.maximum(h @ w2 + b2, 0.0)
    h = jnp.maximum(h @ w3 + b3, 0.0)
    logits = h @ w4 + b4
    return jax.nn.log_softmax(logits, axis=1)


if __name__ == "__main__":
    key = jax.random.PRNGKey(0)
    k_params, k_x = jax.random.split(key)

    params = init_params(k_params)
    batch = 2
    x = jax.random.normal(k_x, (batch, D_IN), jnp.float32)
    y_ref = reference_forward(x, params)

    # Default path: bf16 streaming, f32 accumulation (looser tolerance).
    y_bf16 = jax.block_until_ready(mlp_forward(x, params))
    assert y_bf16.shape == (batch, D_OUT)
    assert jnp.allclose(y_bf16, y_ref, atol=5e-2, rtol=5e-2), "bf16 mismatch vs reference"

    # f32 path (tight tolerance vs f32 reference).
    y_f32 = jax.block_until_ready(mlp_forward(x, params, compute_dtype=jnp.float32))
    assert y_f32.shape == (batch, D_OUT)
    assert jnp.allclose(y_f32, y_ref, atol=1e-4, rtol=1e-4), "f32 mismatch vs reference"

    # Multi-step grid: B=40 -> 2 balanced tiles of 24 rows (padded batch 48);
    # exercises row padding, balanced tiling and the "parallel" grid axis.
    x2 = jax.random.normal(jax.random.PRNGKey(1), (40, D_IN), jnp.float32)
    y2 = jax.block_until_ready(mlp_forward(x2, params))
    y2_ref = reference_forward(x2, params)
    assert y2.shape == (40, D_OUT)
    assert jnp.allclose(y2, y2_ref, atol=5e-2, rtol=5e-2), "multi-step mismatch vs reference"

    print("KERNEL_OK")
</pallas_src>

<mosaic_0001>
module attributes {stable_mosaic.version = 11 : i64} {
  func.func @mlp_kernel(%arg0: i32, %arg1: memref<8x784xbf16, #tpu.memory_space<vmem>>, %arg2: memref<784x128xbf16, #tpu.memory_space<vmem>>, %arg3: memref<1x128xf32, #tpu.memory_space<vmem>>, %arg4: memref<128x128xbf16, #tpu.memory_space<vmem>>, %arg5: memref<1x128xf32, #tpu.memory_space<vmem>>, %arg6: memref<128x128xbf16, #tpu.memory_space<vmem>>, %arg7: memref<1x128xf32, #tpu.memory_space<vmem>>, %arg8: memref<128x128xbf16, #tpu.memory_space<vmem>>, %arg9: memref<1x128xf32, #tpu.memory_space<vmem>>, %arg10: memref<8x10xf32, #tpu.memory_space<vmem>>) attributes {dimension_semantics = [#tpu.dimension_semantics<parallel>], iteration_bounds = array<i64: 1>, scalar_prefetch = 0 : i64, scratch_operands = 0 : i64, tpu.core_type = #tpu.core_type<tc>, window_params = [{transform_indices = @transform_0, window_bounds = array<i64: 8, 784>}, {pipeline_mode = #tpu.pipeline_mode<synchronous>, transform_indices = @transform_1, window_bounds = array<i64: 784, 128>}, {pipeline_mode = #tpu.pipeline_mode<synchronous>, transform_indices = @transform_2, window_bounds = array<i64: 1, 128>}, {pipeline_mode = #tpu.pipeline_mode<synchronous>, transform_indices = @transform_3, window_bounds = array<i64: 128, 128>}, {pipeline_mode = #tpu.pipeline_mode<synchronous>, transform_indices = @transform_4, window_bounds = array<i64: 1, 128>}, {pipeline_mode = #tpu.pipeline_mode<synchronous>, transform_indices = @transform_5, window_bounds = array<i64: 128, 128>}, {pipeline_mode = #tpu.pipeline_mode<synchronous>, transform_indices = @transform_6, window_bounds = array<i64: 1, 128>}, {pipeline_mode = #tpu.pipeline_mode<synchronous>, transform_indices = @transform_7, window_bounds = array<i64: 128, 128>}, {pipeline_mode = #tpu.pipeline_mode<synchronous>, transform_indices = @transform_8, window_bounds = array<i64: 1, 128>}, {transform_indices = @transform_9, window_bounds = array<i64: 8, 10>}]} {
    %c0 = arith.constant 0 : index
    %c0_0 = arith.constant 0 : index
    %0 = vector.load %arg1[%c0, %c0_0] : memref<8x784xbf16, #tpu.memory_space<vmem>>, vector<8x784xbf16>
    %c0_1 = arith.constant 0 : index
    %c0_2 = arith.constant 0 : index
    %1 = vector.load %arg2[%c0_1, %c0_2] : memref<784x128xbf16, #tpu.memory_space<vmem>>, vector<784x128xbf16>
    %cst = arith.constant dense<0.000000e+00> : vector<8x128xf32>
    %2 = tpu.matmul %0, %1, %cst {dimension_numbers = #tpu.dot_dimension_numbers<[1], [0], [0], [1], [0, 0, 1, 1], [], []>} : vector<8x784xbf16>, vector<784x128xbf16>, vector<8x128xf32> -> vector<8x128xf32>
    %c0_3 = arith.constant 0 : index
    %c0_4 = arith.constant 0 : index
    %3 = vector.load %arg3[%c0_3, %c0_4] : memref<1x128xf32, #tpu.memory_space<vmem>>, vector<1x128xf32>
    %4 = vector.broadcast %3 : vector<1x128xf32> to vector<8x128xf32>
    %5 = arith.addf %2, %4 : vector<8x128xf32>
    %cst_5 = arith.constant 0.000000e+00 : f32
    %6 = vector.broadcast %cst_5 : f32 to vector<8x128xf32>
    %7 = arith.maximumf %5, %6 : vector<8x128xf32>
    %8 = arith.truncf %7 : vector<8x128xf32> to vector<8x128xbf16>
    %c0_6 = arith.constant 0 : index
    %c0_7 = arith.constant 0 : index
    %9 = vector.load %arg4[%c0_6, %c0_7] : memref<128x128xbf16, #tpu.memory_space<vmem>>, vector<128x128xbf16>
    %cst_8 = arith.constant dense<0.000000e+00> : vector<8x128xf32>
    %10 = tpu.matmul %8, %9, %cst_8 {dimension_numbers = #tpu.dot_dimension_numbers<[1], [0], [0], [1], [0, 0, 1, 1], [], []>} : vector<8x128xbf16>, vector<128x128xbf16>, vector<8x128xf32> -> vector<8x128xf32>
    %c0_9 = arith.constant 0 : index
    %c0_10 = arith.constant 0 : index
    %11 = vector.load %arg5[%c0_9, %c0_10] : memref<1x128xf32, #tpu.memory_space<vmem>>, vector<1x128xf32>
    %12 = vector.broadcast %11 : vector<1x128xf32> to vector<8x128xf32>
    %13 = arith.addf %10, %12 : vector<8x128xf32>
    %cst_11 = arith.constant 0.000000e+00 : f32
    %14 = vector.broadcast %cst_11 : f32 to vector<8x128xf32>
    %15 = arith.maximumf %13, %14 : vector<8x128xf32>
    %16 = arith.truncf %15 : vector<8x128xf32> to vector<8x128xbf16>
    %c0_12 = arith.constant 0 : index
    %c0_13 = arith.constant 0 : index
    %17 = vector.load %arg6[%c0_12, %c0_13] : memref<128x128xbf16, #tpu.memory_space<vmem>>, vector<128x128xbf16>
    %cst_14 = arith.constant dense<0.000000e+00> : vector<8x128xf32>
    %18 = tpu.matmul %16, %17, %cst_14 {dimension_numbers = #tpu.dot_dimension_numbers<[1], [0], [0], [1], [0, 0, 1, 1], [], []>} : vector<8x128xbf16>, vector<128x128xbf16>, vector<8x128xf32> -> vector<8x128xf32>
    %c0_15 = arith.constant 0 : index
    %c0_16 = arith.constant 0 : index
    %19 = vector.load %arg7[%c0_15, %c0_16] : memref<1x128xf32, #tpu.memory_space<vmem>>, vector<1x128xf32>
    %20 = vector.broadcast %19 : vector<1x128xf32> to vector<8x128xf32>
    %21 = arith.addf %18, %20 : vector<8x128xf32>
    %cst_17 = arith.constant 0.000000e+00 : f32
    %22 = vector.broadcast %cst_17 : f32 to vector<8x128xf32>
    %23 = arith.maximumf %21, %22 : vector<8x128xf32>
    %24 = arith.truncf %23 : vector<8x128xf32> to vector<8x128xbf16>
    %c0_18 = arith.constant 0 : index
    %c0_19 = arith.constant 0 : index
    %25 = vector.load %arg8[%c0_18, %c0_19] : memref<128x128xbf16, #tpu.memory_space<vmem>>, vector<128x128xbf16>
    %cst_20 = arith.constant dense<0.000000e+00> : vector<8x128xf32>
    %26 = tpu.matmul %24, %25, %cst_20 {dimension_numbers = #tpu.dot_dimension_numbers<[1], [0], [0], [1], [0, 0, 1, 1], [], []>} : vector<8x128xbf16>, vector<128x128xbf16>, vector<8x128xf32> -> vector<8x128xf32>
    %c0_21 = arith.constant 0 : index
    %c0_22 = arith.constant 0 : index
    %27 = vector.load %arg9[%c0_21, %c0_22] : memref<1x128xf32, #tpu.memory_space<vmem>>, vector<1x128xf32>
    %28 = vector.broadcast %27 : vector<1x128xf32> to vector<8x128xf32>
    %29 = arith.addf %26, %28 : vector<8x128xf32>
    %cst_23 = arith.constant dense<0xFF800000> : vector<8xf32>
    %30 = vector.multi_reduction <maximumf>, %29, %cst_23 [1] : vector<8x128xf32> to vector<8xf32>
    %31 = vector.shape_cast %30 : vector<8xf32> to vector<8x1xf32>
    %32 = vector.broadcast %31 : vector<8x1xf32> to vector<8x128xf32>
    %33 = arith.subf %29, %32 : vector<8x128xf32>
    %34 = math.exp %33 : vector<8x128xf32>
    %cst_24 = arith.constant dense<0.000000e+00> : vector<8xf32>
    %35 = vector.multi_reduction <add>, %34, %cst_24 [1] : vector<8x128xf32> to vector<8xf32>
    %36 = vector.shape_cast %35 : vector<8xf32> to vector<8x1xf32>
    %37 = math.log %36 : vector<8x1xf32>
    %38 = vector.broadcast %37 : vector<8x1xf32> to vector<8x128xf32>
    %39 = arith.subf %33, %38 : vector<8x128xf32>
    %40 = vector.extract_strided_slice %39 {offsets = [0, 0], sizes = [8, 10], strides = [1, 1]} : vector<8x128xf32> to vector<8x10xf32>
    %c0_25 = arith.constant 0 : index
    %c0_26 = arith.constant 0 : index
    %41 = vector.load %arg10[%c0_25, %c0_26] : memref<8x10xf32, #tpu.memory_space<vmem>>, vector<8x10xf32>
    tpu.vector_store %arg10[%c0_25, %c0_26], %40 {strides = array<i32>} : memref<8x10xf32, #tpu.memory_space<vmem>>, vector<8x10xf32>,
    return
  }
  func.func @transform_0(%arg0: i32) -> (i32, i32) {
    %c0_i32 = arith.constant 0 : i32
    %c0_i32_0 = arith.constant 0 : i32
    return %arg0, %c0_i32 : i32, i32
  }
  func.func @transform_1(%arg0: i32) -> (i32, i32) {
    %c0_i32 = arith.constant 0 : i32
    %c0_i32_0 = arith.constant 0 : i32
    %c0_i32_1 = arith.constant 0 : i32
    return %c0_i32, %c0_i32_0 : i32, i32
  }
  func.func @transform_2(%arg0: i32) -> (i32, i32) {
    %c0_i32 = arith.constant 0 : i32
    %c0_i32_0 = arith.constant 0 : i32
    %c0_i32_1 = arith.constant 0 : i32
    return %c0_i32, %c0_i32_0 : i32, i32
  }
  func.func @transform_3(%arg0: i32) -> (i32, i32) {
    %c0_i32 = arith.constant 0 : i32
    %c0_i32_0 = arith.constant 0 : i32
    %c0_i32_1 = arith.constant 0 : i32
    return %c0_i32, %c0_i32_0 : i32, i32
  }
  func.func @transform_4(%arg0: i32) -> (i32, i32) {
    %c0_i32 = arith.constant 0 : i32
    %c0_i32_0 = arith.constant 0 : i32
    %c0_i32_1 = arith.constant 0 : i32
    return %c0_i32, %c0_i32_0 : i32, i32
  }
  func.func @transform_5(%arg0: i32) -> (i32, i32) {
    %c0_i32 = arith.constant 0 : i32
    %c0_i32_0 = arith.constant 0 : i32
    %c0_i32_1 = arith.constant 0 : i32
    return %c0_i32, %c0_i32_0 : i32, i32
  }
  func.func @transform_6(%arg0: i32) -> (i32, i32) {
    %c0_i32 = arith.constant 0 : i32
    %c0_i32_0 = arith.constant 0 : i32
    %c0_i32_1 = arith.constant 0 : i32
    return %c0_i32, %c0_i32_0 : i32, i32
  }
  func.func @transform_7(%arg0: i32) -> (i32, i32) {
    %c0_i32 = arith.constant 0 : i32
    %c0_i32_0 = arith.constant 0 : i32
    %c0_i32_1 = arith.constant 0 : i32
    return %c0_i32, %c0_i32_0 : i32, i32
  }
  func.func @transform_8(%arg0: i32) -> (i32, i32) {
    %c0_i32 = arith.constant 0 : i32
    %c0_i32_0 = arith.constant 0 : i32
    %c0_i32_1 = arith.constant 0 : i32
    return %c0_i32, %c0_i32_0 : i32, i32
  }
  func.func @transform_9(%arg0: i32) -> (i32, i32) {
    %c0_i32 = arith.constant 0 : i32
    %c0_i32_0 = arith.constant 0 : i32
    return %arg0, %c0_i32 : i32, i32
  }
}

module attributes {stable_mosaic.version = 11 : i64} {
  func.func @mlp_kernel(%arg0: i32, %arg1: memref<8x784xbf16, #tpu.memory_space<vmem>>, %arg2: memref<784x128xbf16, #tpu.memory_space<vmem>>, %arg3: memref<1x128xf32, #tpu.memory_space<vmem>>, %arg4: memref<128x128xbf16, #tpu.memory_space<vmem>>, %arg5: memref<1x128xf32, #tpu.memory_space<vmem>>, %arg6: memref<128x128xbf16, #tpu.memory_space<vmem>>, %arg7: memref<1x128xf32, #tpu.memory_space<vmem>>, %arg8: memref<128x128xbf16, #tpu.memory_space<vmem>>, %arg9: memref<1x128xf32, #tpu.memory_space<vmem>>, %arg10: memref<8x10xf32, #tpu.memory_space<vmem>>) attributes {dimension_semantics = [#tpu.dimension_semantics<parallel>], iteration_bounds = array<i64: 1>, scalar_prefetch = 0 : i64, scratch_operands = 0 : i64, tpu.core_type = #tpu.core_type<tc>, window_params = [{transform_indices = @transform_0, window_bounds = array<i64: 8, 784>}, {pipeline_mode = #tpu.pipeline_mode<synchronous>, transform_indices = @transform_1, window_bounds = array<i64: 784, 128>}, {pipeline_mode = #tpu.pipeline_mode<synchronous>, transform_indices = @transform_2, window_bounds = array<i64: 1, 128>}, {pipeline_mode = #tpu.pipeline_mode<synchronous>, transform_indices = @transform_3, window_bounds = array<i64: 128, 128>}, {pipeline_mode = #tpu.pipeline_mode<synchronous>, transform_indices = @transform_4, window_bounds = array<i64: 1, 128>}, {pipeline_mode = #tpu.pipeline_mode<synchronous>, transform_indices = @transform_5, window_bounds = array<i64: 128, 128>}, {pipeline_mode = #tpu.pipeline_mode<synchronous>, transform_indices = @transform_6, window_bounds = array<i64: 1, 128>}, {pipeline_mode = #tpu.pipeline_mode<synchronous>, transform_indices = @transform_7, window_bounds = array<i64: 128, 128>}, {pipeline_mode = #tpu.pipeline_mode<synchronous>, transform_indices = @transform_8, window_bounds = array<i64: 1, 128>}, {transform_indices = @transform_9, window_bounds = array<i64: 8, 10>}]} {
    %c0 = arith.constant 0 : index
    %c0_0 = arith.constant 0 : index
    %0 = vector.load %arg1[%c0, %c0_0] : memref<8x784xbf16, #tpu.memory_space<vmem>>, vector<8x784xbf16>
    %c0_1 = arith.constant 0 : index
    %c0_2 = arith.constant 0 : index
    %1 = vector.load %arg2[%c0_1, %c0_2] : memref<784x128xbf16, #tpu.memory_space<vmem>>, vector<784x128xbf16>
    %cst = arith.constant dense<0.000000e+00> : vector<8x128xf32>
    %2 = tpu.matmul %0, %1, %cst {dimension_numbers = #tpu.dot_dimension_numbers<[1], [0], [0], [1], [0, 0, 1, 1], [], []>} : vector<8x784xbf16>, vector<784x128xbf16>, vector<8x128xf32> -> vector<8x128xf32>
    %c0_3 = arith.constant 0 : index
    %c0_4 = arith.constant 0 : index
    %3 = vector.load %arg3[%c0_3, %c0_4] : memref<1x128xf32, #tpu.memory_space<vmem>>, vector<1x128xf32>
    %4 = vector.broadcast %3 : vector<1x128xf32> to vector<8x128xf32>
    %5 = arith.addf %2, %4 : vector<8x128xf32>
    %cst_5 = arith.constant 0.000000e+00 : f32
    %6 = vector.broadcast %cst_5 : f32 to vector<8x128xf32>
    %7 = arith.maximumf %5, %6 : vector<8x128xf32>
    %8 = arith.truncf %7 : vector<8x128xf32> to vector<8x128xbf16>
    %c0_6 = arith.constant 0 : index
    %c0_7 = arith.constant 0 : index
    %9 = vector.load %arg4[%c0_6, %c0_7] : memref<128x128xbf16, #tpu.memory_space<vmem>>, vector<128x128xbf16>
    %cst_8 = arith.constant dense<0.000000e+00> : vector<8x128xf32>
    %10 = tpu.matmul %8, %9, %cst_8 {dimension_numbers = #tpu.dot_dimension_numbers<[1], [0], [0], [1], [0, 0, 1, 1], [], []>} : vector<8x128xbf16>, vector<128x128xbf16>, vector<8x128xf32> -> vector<8x128xf32>
    %c0_9 = arith.constant 0 : index
    %c0_10 = arith.constant 0 : index
    %11 = vector.load %arg5[%c0_9, %c0_10] : memref<1x128xf32, #tpu.memory_space<vmem>>, vector<1x128xf32>
    %12 = vector.broadcast %11 : vector<1x128xf32> to vector<8x128xf32>
    %13 = arith.addf %10, %12 : vector<8x128xf32>
    %cst_11 = arith.constant 0.000000e+00 : f32
    %14 = vector.broadcast %cst_11 : f32 to vector<8x128xf32>
    %15 = arith.maximumf %13, %14 : vector<8x128xf32>
    %16 = arith.truncf %15 : vector<8x128xf32> to vector<8x128xbf16>
    %c0_12 = arith.constant 0 : index
    %c0_13 = arith.constant 0 : index
    %17 = vector.load %arg6[%c0_12, %c0_13] : memref<128x128xbf16, #tpu.memory_space<vmem>>, vector<128x128xbf16>
    %cst_14 = arith.constant dense<0.000000e+00> : vector<8x128xf32>
    %18 = tpu.matmul %16, %17, %cst_14 {dimension_numbers = #tpu.dot_dimension_numbers<[1], [0], [0], [1], [0, 0, 1, 1], [], []>} : vector<8x128xbf16>, vector<128x128xbf16>, vector<8x128xf32> -> vector<8x128xf32>
    %c0_15 = arith.constant 0 : index
    %c0_16 = arith.constant 0 : index
    %19 = vector.load %arg7[%c0_15, %c0_16] : memref<1x128xf32, #tpu.memory_space<vmem>>, vector<1x128xf32>
    %20 = vector.broadcast %19 : vector<1x128xf32> to vector<8x128xf32>
    %21 = arith.addf %18, %20 : vector<8x128xf32>
    %cst_17 = arith.constant 0.000000e+00 : f32
    %22 = vector.broadcast %cst_17 : f32 to vector<8x128xf32>
    %23 = arith.maximumf %21, %22 : vector<8x128xf32>
    %24 = arith.truncf %23 : vector<8x128xf32> to vector<8x128xbf16>
    %c0_18 = arith.constant 0 : index
    %c0_19 = arith.constant 0 : index
    %25 = vector.load %arg8[%c0_18, %c0_19] : memref<128x128xbf16, #tpu.memory_space<vmem>>, vector<128x128xbf16>
    %cst_20 = arith.constant dense<0.000000e+00> : vector<8x128xf32>
    %26 = tpu.matmul %24, %25, %cst_20 {dimension_numbers = #tpu.dot_dimension_numbers<[1], [0], [0], [1], [0, 0, 1, 1], [], []>} : vector<8x128xbf16>, vector<128x128xbf16>, vector<8x128xf32> -> vector<8x128xf32>
    %c0_21 = arith.constant 0 : index
    %c0_22 = arith.constant 0 : index
    %27 = vector.load %arg9[%c0_21, %c0_22] : memref<1x128xf32, #tpu.memory_space<vmem>>, vector<1x128xf32>
    %28 = vector.broadcast %27 : vector<1x128xf32> to vector<8x128xf32>
    %29 = arith.addf %26, %28 : vector<8x128xf32>
    %cst_23 = arith.constant dense<0xFF800000> : vector<8xf32>
    %30 = vector.multi_reduction <maximumf>, %29, %cst_23 [1] : vector<8x128xf32> to vector<8xf32>
    %31 = vector.shape_cast %30 : vector<8xf32> to vector<8x1xf32>
    %32 = vector.broadcast %31 : vector<8x1xf32> to vector<8x128xf32>
    %33 = arith.subf %29, %32 : vector<8x128xf32>
    %34 = math.exp %33 : vector<8x128xf32>
    %cst_24 = arith.constant dense<0.000000e+00> : vector<8xf32>
    %35 = vector.multi_reduction <add>, %34, %cst_24 [1] : vector<8x128xf32> to vector<8xf32>
    %36 = vector.shape_cast %35 : vector<8xf32> to vector<8x1xf32>
    %37 = math.log %36 : vector<8x1xf32>
    %38 = vector.broadcast %37 : vector<8x1xf32> to vector<8x128xf32>
    %39 = arith.subf %33, %38 : vector<8x128xf32>
    %40 = vector.extract_strided_slice %39 {offsets = [0, 0], sizes = [8, 10], strides = [1, 1]} : vector<8x128xf32> to vector<8x10xf32>
    %c0_25 = arith.constant 0 : index
    %c0_26 = arith.constant 0 : index
    %41 = vector.load %arg10[%c0_25, %c0_26] : memref<8x10xf32, #tpu.memory_space<vmem>>, vector<8x10xf32>
    tpu.vector_store %arg10[%c0_25, %c0_26], %40 {strides = array<i32>} : memref<8x10xf32, #tpu.memory_space<vmem>>, vector<8x10xf32>,
    return
  }
  func.func @transform_0(%arg0: i32) -> (i32, i32) {
    %c0_i32 = arith.constant 0 : i32
    %c0_i32_0 = arith.constant 0 : i32
    return %arg0, %c0_i32 : i32, i32
  }
  func.func @transform_1(%arg0: i32) -> (i32, i32) {
    %c0_i32 = arith.constant 0 : i32
    %c0_i32_0 = arith.constant 0 : i32
    %c0_i32_1 = arith.constant 0 : i32
    return %c0_i32, %c0_i32_0 : i32, i32
  }
  func.func @transform_2(%arg0: i32) -> (i32, i32) {
    %c0_i32 = arith.constant 0 : i32
    %c0_i32_0 = arith.constant 0 : i32
    %c0_i32_1 = arith.constant 0 : i32
    return %c0_i32, %c0_i32_0 : i32, i32
  }
  func.func @transform_3(%arg0: i32) -> (i32, i32) {
    %c0_i32 = arith.constant 0 : i32
    %c0_i32_0 = arith.constant 0 : i32
    %c0_i32_1 = arith.constant 0 : i32
    return %c0_i32, %c0_i32_0 : i32, i32
  }
  func.func @transform_4(%arg0: i32) -> (i32, i32) {
    %c0_i32 = arith.constant 0 : i32
    %c0_i32_0 = arith.constant 0 : i32
    %c0_i32_1 = arith.constant 0 : i32
    return %c0_i32, %c0_i32_0 : i32, i32
  }
  func.func @transform_5(%arg0: i32) -> (i32, i32) {
    %c0_i32 = arith.constant 0 : i32
    %c0_i32_0 = arith.constant 0 : i32
    %c0_i32_1 = arith.constant 0 : i32
    return %c0_i32, %c0_i32_0 : i32, i32
  }
  func.func @transform_6(%arg0: i32) -> (i32, i32) {
    %c0_i32 = arith.constant 0 : i32
    %c0_i32_0 = arith.constant 0 : i32
    %c0_i32_1 = arith.constant 0 : i32
    return %c0_i32, %c0_i32_0 : i32, i32
  }
  func.func @transform_7(%arg0: i32) -> (i32, i32) {
    %c0_i32 = arith.constant 0 : i32
    %c0_i32_0 = arith.constant 0 : i32
    %c0_i32_1 = arith.constant 0 : i32
    return %c0_i32, %c0_i32_0 : i32, i32
  }
  func.func @transform_8(%arg0: i32) -> (i32, i32) {
    %c0_i32 = arith.constant 0 : i32
    %c0_i32_0 = arith.constant 0 : i32
    %c0_i32_1 = arith.constant 0 : i32
    return %c0_i32, %c0_i32_0 : i32, i32
  }
  func.func @transform_9(%arg0: i32) -> (i32, i32) {
    %c0_i32 = arith.constant 0 : i32
    %c0_i32_0 = arith.constant 0 : i32
    return %arg0, %c0_i32 : i32, i32
  }
}

</mosaic_0001>

<llo_original>
// kernel: tpu_custom_call.1
$region0: #{tpu_custom_call.1}
  #allocation0 [shape = 'u32[]', space=smem, size = 0x4, offset = 0x4, fixed_abs, tag = 'smem constant byte address 0x4 - core index']
  #allocation1 [shape = 'u32[72,128]{1,0:T(1,128)}', space=vmem, size = 0x9000, scoped, tag = 'internal scratch']
  %s0 = inlined_call_operand.hbm [shape: bf16[8,784], index: 0, kind: input, shape index: {}]
  %s1 = inlined_call_operand.hbm [shape: bf16[784,128], index: 1, kind: input, shape index: {}]
  %s2 = inlined_call_operand.vmem [shape: f32[1,128], index: 2, kind: input, shape index: {}]
  %s3 = inlined_call_operand.hbm [shape: bf16[128,128], index: 3, kind: input, shape index: {}]
  %s4 = inlined_call_operand.vmem [shape: f32[1,128], index: 4, kind: input, shape index: {}]
  %s5 = inlined_call_operand.hbm [shape: bf16[128,128], index: 5, kind: input, shape index: {}]
  %s6 = inlined_call_operand.vmem [shape: f32[1,128], index: 6, kind: input, shape index: {}]
  %s7 = inlined_call_operand.hbm [shape: bf16[128,128], index: 7, kind: input, shape index: {}]
  %s8 = inlined_call_operand.vmem [shape: f32[1,128], index: 8, kind: input, shape index: {}]
  %s9 = inlined_call_operand.hbm [shape: f32[8,10], index: 9, kind: output, shape index: {}]
  %s10 = sld [smem:[#allocation0]]
  $region66: #{tpu_custom_call.1} parent=0
    _
  %s12 = ssub.s32 1, %s10
  %s13 = scalar_select 0, %s12, %s10
  $region1: #{tpu_custom_call.1} parent=0
    #allocation2 [shape = 'u8[14336]{0}', space=vmem, size = 0x3800, scoped, tag = 'input window, operand 0, single buffered']
    #allocation3 [shape = 's32[1]{0}', space=sflag, size = 0x4, scoped, tag = 'scoped memory for tpu_custom_call.1']
    #allocation4 [shape = 's32[1]{0}', space=sflag, size = 0x4, scoped, tag = 'scoped memory for tpu_custom_call.1']
    #allocation5 [shape = 'u8[200704]{0}', space=vmem, size = 0x31000, scoped, tag = 'input window, operand 1, single buffered']
    #allocation6 [shape = 's32[1]{0}', space=sflag, size = 0x4, scoped, tag = 'scoped memory for tpu_custom_call.1']
    #allocation7 [shape = 'u8[32768]{0}', space=vmem, size = 0x8000, scoped, tag = 'input window, operand 3, single buffered']
    #allocation8 [shape = 'u8[32768]{0}', space=vmem, size = 0x8000, scoped, tag = 'input window, operand 5, single buffered']
    #allocation9 [shape = 's32[1]{0}', space=sflag, size = 0x4, scoped, tag = 'scoped memory for tpu_custom_call.1']
    #allocation10 [shape = 'u8[32768]{0}', space=vmem, size = 0x8000, scoped, tag = 'input window, operand 7, single buffered']
    #allocation11 [shape = 'u8[4096]{0}', space=vmem, size = 0x1000, scoped, tag = 'output window, operand 0, single buffered']
    %14 = vsyncpa [#allocation3], 0
    %15 = vsyncpa [#allocation6], 0
    %16 = vsyncpa [#allocation9], 0
    %17 = vsyncpa [#allocation4], 0
    // Predicated region
    $region2: #{tpu_custom_call.1} parent=1 // pred_check
      _
    $region3: #{tpu_custom_call.1} parent=1 // pred_check_branch
      %19 = sbr.rel (0) target = $region5
    $region4: #{tpu_custom_call.1} parent=1 // pred_region
      %21 = vsyncadd [#allocation3], 0
      %s23 = sshll.u32 %s0, 4
      %s24 = int_to_ptr.hbm [resolvable:$true] %s23
      %s25 = sshll.u32 [#allocation2], 4
      %s26 = int_to_ptr.vmem [resolvable:$true] %s25
      %28 = dma.hbm_to_vmem [thread:$0]  %s24, 448, %s26, [#allocation3]
    $region5: #{tpu_custom_call.1} parent=1 // pred_fallthru
      _
    // Predicated region
    $region6: #{tpu_custom_call.1} parent=1 // pred_check
      _
    $region7: #{tpu_custom_call.1} parent=1 // pred_check_branch
      %30 = sbr.rel (0) target = $region9
    $region8: #{tpu_custom_call.1} parent=1 // pred_region
      %32 = vsyncadd [#allocation6], 0
      %s33 = sshll.u32 %s1, 4
      %s34 = int_to_ptr.hbm [resolvable:$true] %s33
      %s35 = sshll.u32 [#allocation5], 4
      %s36 = int_to_ptr.vmem [resolvable:$true] %s35
      %41 = dma.hbm_to_vmem [thread:$0]  %s34, 6272, %s36, [#allocation6], 64, 64, 4
    $region9: #{tpu_custom_call.1} parent=1 // pred_fallthru
      _
    // Predicated region
    $region10: #{tpu_custom_call.1} parent=1 // pred_check
      _
    $region11: #{tpu_custom_call.1} parent=1 // pred_check_branch
      %43 = sbr.rel (0) target = $region13
    $region12: #{tpu_custom_call.1} parent=1 // pred_region
      _
    $region13: #{tpu_custom_call.1} parent=1 // pred_fallthru
      _
    // Predicated region
    $region14: #{tpu_custom_call.1} parent=1 // pred_check
      _
    $region15: #{tpu_custom_call.1} parent=1 // pred_check_branch
      %45 = sbr.rel (0) target = $region17
    $region16: #{tpu_custom_call.1} parent=1 // pred_region
      %47 = vsyncadd [#allocation6], 0
      %s48 = sshll.u32 %s3, 4
      %s49 = int_to_ptr.hbm [resolvable:$true] %s48
      %s50 = sshll.u32 [#allocation7], 4
      %s51 = int_to_ptr.vmem [resolvable:$true] %s50
      %56 = dma.hbm_to_vmem [thread:$0]  %s49, 1024, %s51, [#allocation6], 64, 64, 4
    $region17: #{tpu_custom_call.1} parent=1 // pred_fallthru
      _
    // Predicated region
    $region18: #{tpu_custom_call.1} parent=1 // pred_check
      _
    $region19: #{tpu_custom_call.1} parent=1 // pred_check_branch
      %58 = sbr.rel (0) target = $region21
    $region20: #{tpu_custom_call.1} parent=1 // pred_region
      _
    $region21: #{tpu_custom_call.1} parent=1 // pred_fallthru
      _
    // Predicated region
    $region22: #{tpu_custom_call.1} parent=1 // pred_check
      _
    $region23: #{tpu_custom_call.1} parent=1 // pred_check_branch
      %60 = sbr.rel (0) target = $region25
    $region24: #{tpu_custom_call.1} parent=1 // pred_region
      %62 = vsyncadd [#allocation9], 0
      %s63 = sshll.u32 %s5, 4
      %s64 = int_to_ptr.hbm [resolvable:$true] %s63
      %s65 = sshll.u32 [#allocation8], 4
      %s66 = int_to_ptr.vmem [resolvable:$true] %s65
      %71 = dma.hbm_to_vmem [thread:$0]  %s64, 1024, %s66, [#allocation9], 64, 64, 4
    $region25: #{tpu_custom_call.1} parent=1 // pred_fallthru
      _
    // Predicated region
    $region26: #{tpu_custom_call.1} parent=1 // pred_check
      _
    $region27: #{tpu_custom_call.1} parent=1 // pred_check_branch
      %73 = sbr.rel (0) target = $region29
    $region28: #{tpu_custom_call.1} parent=1 // pred_region
      _
    $region29: #{tpu_custom_call.1} parent=1 // pred_fallthru
      _
    // Predicated region
    $region30: #{tpu_custom_call.1} parent=1 // pred_check
      _
    $region31: #{tpu_custom_call.1} parent=1 // pred_check_branch
      %75 = sbr.rel (0) target = $region33
    $region32: #{tpu_custom_call.1} parent=1 // pred_region
      %77 = vsyncadd [#allocation9], 0
      %s78 = sshll.u32 %s7, 4
      %s79 = int_to_ptr.hbm [resolvable:$true] %s78
      %s80 = sshll.u32 [#allocation10], 4
      %s81 = int_to_ptr.vmem [resolvable:$true] %s80
      %86 = dma.hbm_to_vmem [thread:$0]  %s79, 1024, %s81, [#allocation9], 64, 64, 4
    $region33: #{tpu_custom_call.1} parent=1 // pred_fallthru
      _
    // Predicated region
    $region34: #{tpu_custom_call.1} parent=1 // pred_check
      _
    $region35: #{tpu_custom_call.1} parent=1 // pred_check_branch
      %88 = sbr.rel (0) target = $region37
    $region36: #{tpu_custom_call.1} parent=1 // pred_region
      _
    $region37: #{tpu_custom_call.1} parent=1 // pred_fallthru
      _
    // Predicated region
    $region38: #{tpu_custom_call.1} parent=1 // pred_check
      _
    $region39: #{tpu_custom_call.1} parent=1 // pred_check_branch
      %90 = sbr.rel (0) target = $region41
    $region40: #{tpu_custom_call.1} parent=1 // pred_region
      %92 = dma.done [#allocation3], 448
    $region41: #{tpu_custom_call.1} parent=1 // pred_fallthru
      _
    // Predicated region
    $region42: #{tpu_custom_call.1} parent=1 // pred_check
      _
    $region43: #{tpu_custom_call.1} parent=1 // pred_check_branch
      %94 = sbr.rel (0) target = $region45
    $region44: #{tpu_custom_call.1} parent=1 // pred_region
      %96 = dma.done [#allocation6], 6272
    $region45: #{tpu_custom_call.1} parent=1 // pred_fallthru
      _
    // Predicated region
    $region46: #{tpu_custom_call.1} parent=1 // pred_check
      _
    $region47: #{tpu_custom_call.1} parent=1 // pred_check_branch
      %98 = sbr.rel (0) target = $region49
    $region48: #{tpu_custom_call.1} parent=1 // pred_region
      %100 = dma.done [#allocation6], 1024
    $region49: #{tpu_custom_call.1} parent=1 // pred_fallthru
      _
    // Predicated region
    $region50: #{tpu_custom_call.1} parent=1 // pred_check
      _
    $region51: #{tpu_custom_call.1} parent=1 // pred_check_branch
      %102 = sbr.rel (0) target = $region53
    $region52: #{tpu_custom_call.1} parent=1 // pred_region
      %104 = dma.done [#allocation9], 1024
    $region53: #{tpu_custom_call.1} parent=1 // pred_fallthru
      _
    // Predicated region
    $region54: #{tpu_custom_call.1} parent=1 // pred_check
      _
    $region55: #{tpu_custom_call.1} parent=1 // pred_check_branch
      %106 = sbr.rel (0) target = $region57
    $region56: #{tpu_custom_call.1} parent=1 // pred_region
      %108 = dma.done [#allocation9], 1024
    $region57: #{tpu_custom_call.1} parent=1 // pred_fallthru
      _
    %v110 = vld [vmem:[#allocation2] sm:$0xff]
    %v111 = vld [vmem:[#allocation2 + $0x8] sm:$0xff]
    %v112 = vld [vmem:[#allocation2 + $0x10] sm:$0xff]
    %v113 = vld [vmem:[#allocation2 + $0x18] sm:$0xf]
    %v114 = vld [vmem:[#allocation5] sm:$0xf]
    %v115 = vld [vmem:[#allocation5 + $0x4] sm:$0xf]
    %v116 = vld [vmem:[#allocation5 + $0x8] sm:$0xf]
    %v117 = vld [vmem:[#allocation5 + $0xc] sm:$0xf]
    %v118 = vld [vmem:[#allocation5 + $0x10] sm:$0xf]
    %v119 = vld [vmem:[#allocation5 + $0x14] sm:$0xf]
    %v120 = vld [vmem:[#allocation5 + $0x18] sm:$0xf]
    %v121 = vld [vmem:[#allocation5 + $0x1c] sm:$0xf]
    %v122 = vld [vmem:[#allocation5 + $0x20] sm:$0xf]
    %v123 = vld [vmem:[#allocation5 + $0x24] sm:$0xf]
    %v124 = vld [vmem:[#allocation5 + $0x28] sm:$0xf]
    %v125 = vld [vmem:[#allocation5 + $0x2c] sm:$0xf]
    %v126 = vld [vmem:[#allocation5 + $0x30] sm:$0xf]
    %v127 = vld [vmem:[#allocation5 + $0x34] sm:$0xf]
    %v128 = vld [vmem:[#allocation5 + $0x38] sm:$0xf]
    %v129 = vld [vmem:[#allocation5 + $0x3c] sm:$0xf]
    %v130 = vld [vmem:[#allocation5 + $0x40] sm:$0xf]
    %v131 = vld [vmem:[#allocation5 + $0x44] sm:$0xf]
    %v132 = vld [vmem:[#allocation5 + $0x48] sm:$0xf]
    %v133 = vld [vmem:[#allocation5 + $0x4c] sm:$0xf]
    %v134 = vld [vmem:[#allocation5 + $0x50] sm:$0xf]
    %v135 = vld [vmem:[#allocation5 + $0x54] sm:$0xf]
    %v136 = vld [vmem:[#allocation5 + $0x58] sm:$0xf]
    %v137 = vld [vmem:[#allocation5 + $0x5c] sm:$0xf]
    %v138 = vld [vmem:[#allocation5 + $0x60] sm:$0xf]
    %v139 = vld [vmem:[#allocation5 + $0x64] sm:$0xf]
    %v140 = vld [vmem:[#allocation5 + $0x68] sm:$0xf]
    %v141 = vld [vmem:[#allocation5 + $0x6c] sm:$0xf]
    %v142 = vld [vmem:[#allocation5 + $0x70] sm:$0xf]
    %v143 = vld [vmem:[#allocation5 + $0x74] sm:$0xf]
    %v144 = vld [vmem:[#allocation5 + $0x78] sm:$0xf]
    %v145 = vld [vmem:[#allocation5 + $0x7c] sm:$0xf]
    %v146 = vld [vmem:[#allocation5 + $0x80] sm:$0xf]
    %v147 = vld [vmem:[#allocation5 + $0x84] sm:$0xf]
    %v148 = vld [vmem:[#allocation5 + $0x88] sm:$0xf]
    %v149 = vld [vmem:[#allocation5 + $0x8c] sm:$0xf]
    %v150 = vld [vmem:[#allocation5 + $0x90] sm:$0xf]
    %v151 = vld [vmem:[#allocation5 + $0x94] sm:$0xf]
    %v152 = vld [vmem:[#allocation5 + $0x98] sm:$0xf]
    %v153 = vld [vmem:[#allocation5 + $0x9c] sm:$0xf]
    %v154 = vld [vmem:[#allocation5 + $0xa0] sm:$0xf]
    %v155 = vld [vmem:[#allocation5 + $0xa4] sm:$0xf]
    %v156 = vld [vmem:[#allocation5 + $0xa8] sm:$0xf]
    %v157 = vld [vmem:[#allocation5 + $0xac] sm:$0xf]
    %v158 = vld [vmem:[#allocation5 + $0xb0] sm:$0xf]
    %v159 = vld [vmem:[#allocation5 + $0xb4] sm:$0xf]
    %v160 = vld [vmem:[#allocation5 + $0xb8] sm:$0xf]
    %v161 = vld [vmem:[#allocation5 + $0xbc] sm:$0xf]
    %v162 = vld [vmem:[#allocation5 + $0xc0] sm:$0xf]
    %v163 = vld [vmem:[#allocation5 + $0xc4] sm:$0xf]
    %v164 = vld [vmem:[#allocation5 + $0xc8] sm:$0xf]
    %v165 = vld [vmem:[#allocation5 + $0xcc] sm:$0xf]
    %v166 = vld [vmem:[#allocation5 + $0xd0] sm:$0xf]
    %v167 = vld [vmem:[#allocation5 + $0xd4] sm:$0xf]
    %v168 = vld [vmem:[#allocation5 + $0xd8] sm:$0xf]
    %v169 = vld [vmem:[#allocation5 + $0xdc] sm:$0xf]
    %v170 = vld [vmem:[#allocation5 + $0xe0] sm:$0xf]
    %v171 = vld [vmem:[#allocation5 + $0xe4] sm:$0xf]
    %v172 = vld [vmem:[#allocation5 + $0xe8] sm:$0xf]
    %v173 = vld [vmem:[#allocation5 + $0xec] sm:$0xf]
    %v174 = vld [vmem:[#allocation5 + $0xf0] sm:$0xf]
    %v175 = vld [vmem:[#allocation5 + $0xf4] sm:$0xf]
    %v176 = vld [vmem:[#allocation5 + $0xf8] sm:$0xf]
    %v177 = vld [vmem:[#allocation5 + $0xfc] sm:$0xf]
    %v178 = vld [vmem:[#allocation5 + $0x100] sm:$0xf]
    %v179 = vld [vmem:[#allocation5 + $0x104] sm:$0xf]
    %v180 = vld [vmem:[#allocation5 + $0x108] sm:$0xf]
    %v181 = vld [vmem:[#allocation5 + $0x10c] sm:$0xf]
    %v182 = vld [vmem:[#allocation5 + $0x110] sm:$0xf]
    %v183 = vld [vmem:[#allocation5 + $0x114] sm:$0xf]
    %v184 = vld [vmem:[#allocation5 + $0x118] sm:$0xf]
    %v185 = vld [vmem:[#allocation5 + $0x11c] sm:$0xf]
    %v186 = vld [vmem:[#allocation5 + $0x120] sm:$0xf]
    %v187 = vld [vmem:[#allocation5 + $0x124] sm:$0xf]
    %v188 = vld [vmem:[#allocation5 + $0x128] sm:$0xf]
    %v189 = vld [vmem:[#allocation5 + $0x12c] sm:$0xf]
    %v190 = vld [vmem:[#allocation5 + $0x130] sm:$0xf]
    %v191 = vld [vmem:[#allocation5 + $0x134] sm:$0xf]
    %v192 = vld [vmem:[#allocation5 + $0x138] sm:$0xf]
    %v193 = vld [vmem:[#allocation5 + $0x13c] sm:$0xf]
    %v194 = vld [vmem:[#allocation5 + $0x140] sm:$0xf]
    %v195 = vld [vmem:[#allocation5 + $0x144] sm:$0xf]
    %v196 = vld [vmem:[#allocation5 + $0x148] sm:$0xf]
    %v197 = vld [vmem:[#allocation5 + $0x14c] sm:$0xf]
    %v198 = vld [vmem:[#allocation5 + $0x150] sm:$0xf]
    %v199 = vld [vmem:[#allocation5 + $0x154] sm:$0xf]
    %v200 = vld [vmem:[#allocation5 + $0x158] sm:$0xf]
    %v201 = vld [vmem:[#allocation5 + $0x15c] sm:$0xf]
    %v202 = vld [vmem:[#allocation5 + $0x160] sm:$0xf]
    %v203 = vld [vmem:[#allocation5 + $0x164] sm:$0xf]
    %v204 = vld [vmem:[#allocation5 + $0x168] sm:$0xf]
    %v205 = vld [vmem:[#allocation5 + $0x16c] sm:$0xf]
    %v206 = vld [vmem:[#allocation5 + $0x170] sm:$0xf]
    %v207 = vld [vmem:[#allocation5 + $0x174] sm:$0xf]
    %v208 = vld [vmem:[#allocation5 + $0x178] sm:$0xf]
    %v209 = vld [vmem:[#allocation5 + $0x17c] sm:$0xf]
    %v210 = vld [vmem:[#allocation5 + $0x180] sm:$0xf]
    %v211 = vld [vmem:[#allocation5 + $0x184] sm:$0xf]
    %v212 = vld [vmem:[%s2] sm:$0x1]
    %v214 = vperm.slane %v212, 0
    %v220 = vunpack.c.l.b16 %v110
    %v221 = vunpack.c.h.b16 %v110
    %v222 = vunpack.c.l.b16 %v111
    %v223 = vunpack.c.h.b16 %v111
    %v224 = vunpack.c.l.b16 %v112
    %v225 = vunpack.c.h.b16 %v112
    %v226 = vunpack.c.l.b16 %v113
    %v227 = vpack.c.b16 %v220, %v220
    %v228 = vpack.c.b16 %v221, %v221
    %v229 = vpack.c.b16 %v222, %v222
    %v230 = vpack.c.b16 %v223, %v223
    %v231 = vpack.c.b16 %v224, %v224
    %v232 = vpack.c.b16 %v225, %v225
    %v233 = vpack.c.b16 %v226, %v226
    %v338 = vunpack.c.l.b16 %v114
    %v339 = vunpack.c.l.b16 %v115
    %v340 = vunpack.c.l.b16 %v116
    %v341 = vunpack.c.l.b16 %v117
    %v342 = vunpack.c.l.b16 %v118
    %v343 = vunpack.c.l.b16 %v119
    %v344 = vunpack.c.l.b16 %v120
    %v345 = vunpack.c.l.b16 %v121
    %v346 = vunpack.c.l.b16 %v122
    %v347 = vunpack.c.l.b16 %v123
    %v348 = vunpack.c.l.b16 %v124
    %v349 = vunpack.c.l.b16 %v125
    %v350 = vunpack.c.l.b16 %v126
    %v351 = vunpack.c.l.b16 %v127
    %v352 = vunpack.c.l.b16 %v128
    %v353 = vunpack.c.l.b16 %v129
    %v354 = vunpack.c.l.b16 %v130
    %v355 = vunpack.c.l.b16 %v131
    %v356 = vunpack.c.l.b16 %v132
    %v357 = vunpack.c.l.b16 %v133
    %v358 = vunpack.c.l.b16 %v134
    %v359 = vunpack.c.l.b16 %v135
    %v360 = vunpack.c.l.b16 %v136
    %v361 = vunpack.c.l.b16 %v137
    %v362 = vunpack.c.l.b16 %v138
    %v363 = vunpack.c.l.b16 %v139
    %v364 = vunpack.c.l.b16 %v140
    %v365 = vunpack.c.l.b16 %v141
    %v366 = vunpack.c.l.b16 %v142
    %v367 = vunpack.c.l.b16 %v143
    %v368 = vunpack.c.l.b16 %v144
    %v369 = vunpack.c.l.b16 %v145
    %v370 = vunpack.c.l.b16 %v146
    %v371 = vunpack.c.l.b16 %v147
    %v372 = vunpack.c.l.b16 %v148
    %v373 = vunpack.c.l.b16 %v149
    %v374 = vunpack.c.l.b16 %v150
    %v375 = vunpack.c.l.b16 %v151
    %v376 = vunpack.c.l.b16 %v152
    %v377 = vunpack.c.l.b16 %v153
    %v378 = vunpack.c.l.b16 %v154
    %v379 = vunpack.c.l.b16 %v155
    %v380 = vunpack.c.l.b16 %v156
    %v381 = vunpack.c.l.b16 %v157
    %v382 = vunpack.c.l.b16 %v158
    %v383 = vunpack.c.l.b16 %v159
    %v384 = vunpack.c.l.b16 %v160
    %v385 = vunpack.c.l.b16 %v161
    %v386 = vunpack.c.l.b16 %v162
    %v387 = vunpack.c.l.b16 %v163
    %v388 = vunpack.c.l.b16 %v164
    %v389 = vunpack.c.l.b16 %v165
    %v390 = vunpack.c.l.b16 %v166
    %v391 = vunpack.c.l.b16 %v167
    %v392 = vunpack.c.l.b16 %v168
    %v393 = vunpack.c.l.b16 %v169
    %v394 = vunpack.c.l.b16 %v170
    %v395 = vunpack.c.l.b16 %v171
    %v396 = vunpack.c.l.b16 %v172
    %v397 = vunpack.c.l.b16 %v173
    %v398 = vunpack.c.l.b16 %v174
    %v399 = vunpack.c.l.b16 %v175
    %v400 = vunpack.c.l.b16 %v176
    %v401 = vunpack.c.l.b16 %v177
    %v402 = vunpack.c.l.b16 %v178
    %v403 = vunpack.c.l.b16 %v179
    %v404 = vunpack.c.l.b16 %v180
    %v405 = vunpack.c.l.b16 %v181
    %v406 = vunpack.c.l.b16 %v182
    %v407 = vunpack.c.l.b16 %v183
    %v408 = vunpack.c.l.b16 %v184
    %v409 = vunpack.c.l.b16 %v185
    %v410 = vunpack.c.l.b16 %v186
    %v411 = vunpack.c.l.b16 %v187
    %v412 = vunpack.c.l.b16 %v188
    %v413 = vunpack.c.l.b16 %v189
    %v414 = vunpack.c.l.b16 %v190
    %v415 = vunpack.c.l.b16 %v191
    %v416 = vunpack.c.l.b16 %v192
    %v417 = vunpack.c.l.b16 %v193
    %v418 = vunpack.c.l.b16 %v194
    %v419 = vunpack.c.l.b16 %v195
    %v420 = vunpack.c.l.b16 %v196
    %v421 = vunpack.c.l.b16 %v197
    %v422 = vunpack.c.l.b16 %v198
    %v423 = vunpack.c.l.b16 %v199
    %v424 = vunpack.c.l.b16 %v200
    %v425 = vunpack.c.l.b16 %v201
    %v426 = vunpack.c.l.b16 %v202
    %v427 = vunpack.c.l.b16 %v203
    %v428 = vunpack.c.l.b16 %v204
    %v429 = vunpack.c.l.b16 %v205
    %v430 = vunpack.c.l.b16 %v206
    %v431 = vunpack.c.l.b16 %v207
    %v432 = vunpack.c.l.b16 %v208
    %v433 = vunpack.c.l.b16 %v209
    %v434 = vunpack.c.l.b16 %v210
    %v435 = vunpack.c.l.b16 %v211
    %v436 = vpack.c.b16 %v339, %v338
    %v437 = vpack.c.b16 %v341, %v340
    %v438 = vpack.c.b16 %v343, %v342
    %v439 = vpack.c.b16 %v345, %v344
    %v440 = vpack.c.b16 %v347, %v346
    %v441 = vpack.c.b16 %v349, %v348
    %v442 = vpack.c.b16 %v351, %v350
    %v443 = vpack.c.b16 %v353, %v352
    %v444 = vpack.c.b16 %v355, %v354
    %v445 = vpack.c.b16 %v357, %v356
    %v446 = vpack.c.b16 %v359, %v358
    %v447 = vpack.c.b16 %v361, %v360
    %v448 = vpack.c.b16 %v363, %v362
    %v449 = vpack.c.b16 %v365, %v364
    %v450 = vpack.c.b16 %v367, %v366
    %v451 = vpack.c.b16 %v369, %v368
    %v452 = vpack.c.b16 %v371, %v370
    %v453 = vpack.c.b16 %v373, %v372
    %v454 = vpack.c.b16 %v375, %v374
    %v455 = vpack.c.b16 %v377, %v376
    %v456 = vpack.c.b16 %v379, %v378
    %v457 = vpack.c.b16 %v381, %v380
    %v458 = vpack.c.b16 %v383, %v382
    %v459 = vpack.c.b16 %v385, %v384
    %v460 = vpack.c.b16 %v387, %v386
    %v461 = vpack.c.b16 %v389, %v388
    %v462 = vpack.c.b16 %v391, %v390
    %v463 = vpack.c.b16 %v393, %v392
    %v464 = vpack.c.b16 %v395, %v394
    %v465 = vpack.c.b16 %v397, %v396
    %v466 = vpack.c.b16 %v399, %v398
    %v467 = vpack.c.b16 %v401, %v400
    %v468 = vpack.c.b16 %v403, %v402
    %v469 = vpack.c.b16 %v405, %v404
    %v470 = vpack.c.b16 %v407, %v406
    %v471 = vpack.c.b16 %v409, %v408
    %v472 = vpack.c.b16 %v411, %v410
    %v473 = vpack.c.b16 %v413, %v412
    %v474 = vpack.c.b16 %v415, %v414
    %v475 = vpack.c.b16 %v417, %v416
    %v476 = vpack.c.b16 %v419, %v418
    %v477 = vpack.c.b16 %v421, %v420
    %v478 = vpack.c.b16 %v423, %v422
    %v479 = vpack.c.b16 %v425, %v424
    %v480 = vpack.c.b16 %v427, %v426
    %v481 = vpack.c.b16 %v429, %v428
    %v482 = vpack.c.b16 %v431, %v430
    %v483 = vpack.c.b16 %v433, %v432
    %v484 = vpack.c.b16 %v435, %v434
    %vm534 = vcmask 130048
    %v536 = vsel %vm534, %v233, 0
    %538 = vmatpush.bf16.msra.mxu0 %v443
    %539 = vmatpush.bf16.msra.mxu0 %v442
    %540 = vmatpush.bf16.msra.mxu0 %v441
    %541 = vmatpush.bf16.msra.mxu0 %v440
    %542 = vmatpush.bf16.msra.mxu0 %v439
    %543 = vmatpush.bf16.msra.mxu0 %v438
    %544 = vmatpush.bf16.msra.mxu0 %v437
    %545 = vmatpush.bf16.msra.mxu0 %v436
    %546 = vmatmul.bf16.gmra.mxu0 %v227
    %v547 = vpop.f32.mrf.mxu0
    %v548 = vadd.f32 %v214, %v547
    %v549 = vpop.f32.mrf.mxu0
    %550 = vdwg.mxu0
    %551 = vmatpush.bf16.msra.mxu0 %v451
    %552 = vmatpush.bf16.msra.mxu0 %v450
    %553 = vmatpush.bf16.msra.mxu0 %v449
    %554 = vmatpush.bf16.msra.mxu0 %v448
    %555 = vmatpush.bf16.msra.mxu0 %v447
    %556 = vmatpush.bf16.msra.mxu0 %v446
    %557 = vmatpush.bf16.msra.mxu0 %v445
    %558 = vmatpush.bf16.msra.mxu0 %v444
    %559 = vmatmul.bf16.gmra.mxu0 %v228
    %v560 = vpop.f32.mrf.mxu0
    %v561 = vadd.f32 %v548, %v560
    %v562 = vpop.f32.mrf.mxu0
    %563 = vdwg.mxu0
    %564 = vmatpush.bf16.msra.mxu0 %v459
    %565 = vmatpush.bf16.msra.mxu0 %v458
    %566 = vmatpush.bf16.msra.mxu0 %v457
    %567 = vmatpush.bf16.msra.mxu0 %v456
    %568 = vmatpush.bf16.msra.mxu0 %v455
    %569 = vmatpush.bf16.msra.mxu0 %v454
    %570 = vmatpush.bf16.msra.mxu0 %v453
    %571 = vmatpush.bf16.msra.mxu0 %v452
    %572 = vmatmul.bf16.gmra.mxu0 %v229
    %v573 = vpop.f32.mrf.mxu0
    %v574 = vadd.f32 %v561, %v573
    %v575 = vpop.f32.mrf.mxu0
    %576 = vdwg.mxu0
    %577 = vmatpush.bf16.msra.mxu0 %v467
    %578 = vmatpush.bf16.msra.mxu0 %v466
    %579 = vmatpush.bf16.msra.mxu0 %v465
    %580 = vmatpush.bf16.msra.mxu0 %v464
    %581 = vmatpush.bf16.msra.mxu0 %v463
    %582 = vmatpush.bf16.msra.mxu0 %v462
    %583 = vmatpush.bf16.msra.mxu0 %v461
    %584 = vmatpush.bf16.msra.mxu0 %v460
    %585 = vmatmul.bf16.gmra.mxu0 %v230
    %v586 = vpop.f32.mrf.mxu0
    %v587 = vadd.f32 %v574, %v586
    %v588 = vpop.f32.mrf.mxu0
    %589 = vdwg.mxu0
    %590 = vmatpush.bf16.msra.mxu0 %v475
    %591 = vmatpush.bf16.msra.mxu0 %v474
    %592 = vmatpush.bf16.msra.mxu0 %v473
    %593 = vmatpush.bf16.msra.mxu0 %v472
    %594 = vmatpush.bf16.msra.mxu0 %v471
    %595 = vmatpush.bf16.msra.mxu0 %v470
    %596 = vmatpush.bf16.msra.mxu0 %v469
    %597 = vmatpush.bf16.msra.mxu0 %v468
    %598 = vmatmul.bf16.gmra.mxu0 %v231
    %v599 = vpop.f32.mrf.mxu0
    %v600 = vadd.f32 %v587, %v599
    %v601 = vpop.f32.mrf.mxu0
    %602 = vdwg.mxu0
    %603 = vmatpush.bf16.msra.mxu0 %v483
    %604 = vmatpush.bf16.msra.mxu0 %v482
    %605 = vmatpush.bf16.msra.mxu0 %v481
    %606 = vmatpush.bf16.msra.mxu0 %v480
    %607 = vmatpush.bf16.msra.mxu0 %v479
    %608 = vmatpush.bf16.msra.mxu0 %v478
    %609 = vmatpush.bf16.msra.mxu0 %v477
    %610 = vmatpush.bf16.msra.mxu0 %v476
    %611 = vmatmul.bf16.gmra.mxu0 %v232
    %v612 = vpop.f32.mrf.mxu0
    %v613 = vadd.f32 %v600, %v612
    %v614 = vpop.f32.mrf.mxu0
    %615 = vdwg.mxu0
    %616 = vmatpush.bf16.msra.mxu0 0
    %617 = vmatpush.bf16.msra.mxu0 0
    %618 = vmatpush.bf16.msra.mxu0 0
    %619 = vmatpush.bf16.msra.mxu0 0
    %620 = vmatpush.bf16.msra.mxu0 0
    %621 = vmatpush.bf16.msra.mxu0 0
    %622 = vmatpush.bf16.msra.mxu0 0
    %623 = vmatpush.bf16.msra.mxu0 %v484
    %624 = vmatmul.bf16.gmra.mxu0 %v536
    %v625 = vpop.f32.mrf.mxu0
    %v626 = vadd.f32 %v613, %v625
    %v627 = vpop.f32.mrf.mxu0
    %628 = vdwg.mxu0
    %v629 = vmax.f32 %v626, 0.0
    %v630 = vpack.c.bf16 %v629, %v629
    %v631 = vld [vmem:[#allocation7] sm:$0xf]
    %v632 = vld [vmem:[#allocation7 + $0x4] sm:$0xf]
    %v633 = vld [vmem:[#allocation7 + $0x8] sm:$0xf]
    %v634 = vld [vmem:[#allocation7 + $0xc] sm:$0xf]
    %v635 = vld [vmem:[#allocation7 + $0x10] sm:$0xf]
    %v636 = vld [vmem:[#allocation7 + $0x14] sm:$0xf]
    %v637 = vld [vmem:[#allocation7 + $0x18] sm:$0xf]
    %v638 = vld [vmem:[#allocation7 + $0x1c] sm:$0xf]
    %v639 = vld [vmem:[#allocation7 + $0x20] sm:$0xf]
    %v640 = vld [vmem:[#allocation7 + $0x24] sm:$0xf]
    %v641 = vld [vmem:[#allocation7 + $0x28] sm:$0xf]
    %v642 = vld [vmem:[#allocation7 + $0x2c] sm:$0xf]
    %v643 = vld [vmem:[#allocation7 + $0x30] sm:$0xf]
    %v644 = vld [vmem:[#allocation7 + $0x34] sm:$0xf]
    %v645 = vld [vmem:[#allocation7 + $0x38] sm:$0xf]
    %v646 = vld [vmem:[#allocation7 + $0x3c] sm:$0xf]
    %v647 = vld [vmem:[%s4] sm:$0x1]
    %v649 = vperm.slane %v647, 0
    %v667 = vunpack.c.l.b16 %v631
    %v668 = vunpack.c.l.b16 %v632
    %v669 = vunpack.c.l.b16 %v633
    %v670 = vunpack.c.l.b16 %v634
    %v671 = vunpack.c.l.b16 %v635
    %v672 = vunpack.c.l.b16 %v636
    %v673 = vunpack.c.l.b16 %v637
    %v674 = vunpack.c.l.b16 %v638
    %v675 = vunpack.c.l.b16 %v639
    %v676 = vunpack.c.l.b16 %v640
    %v677 = vunpack.c.l.b16 %v641
    %v678 = vunpack.c.l.b16 %v642
    %v679 = vunpack.c.l.b16 %v643
    %v680 = vunpack.c.l.b16 %v644
    %v681 = vunpack.c.l.b16 %v645
    %v682 = vunpack.c.l.b16 %v646
    %v683 = vpack.c.b16 %v668, %v667
    %v684 = vpack.c.b16 %v670, %v669
    %v685 = vpack.c.b16 %v672, %v671
    %v686 = vpack.c.b16 %v674, %v673
    %v687 = vpack.c.b16 %v676, %v675
    %v688 = vpack.c.b16 %v678, %v677
    %v689 = vpack.c.b16 %v680, %v679
    %v690 = vpack.c.b16 %v682, %v681
    %699 = vmatpush.bf16.msra.mxu0 %v690
    %700 = vmatpush.bf16.msra.mxu0 %v689
    %701 = vmatpush.bf16.msra.mxu0 %v688
    %702 = vmatpush.bf16.msra.mxu0 %v687
    %703 = vmatpush.bf16.msra.mxu0 %v686
    %704 = vmatpush.bf16.msra.mxu0 %v685
    %705 = vmatpush.bf16.msra.mxu0 %v684
    %706 = vmatpush.bf16.msra.mxu0 %v683
    %707 = vmatmul.bf16.gmra.mxu0 %v630
    %v708 = vpop.f32.mrf.mxu0
    %v709 = vadd.f32 %v649, %v708
    %v710 = vpop.f32.mrf.mxu0
    %711 = vdwg.mxu0
    %v712 = vmax.f32 %v709, 0.0
    %v713 = vpack.c.bf16 %v712, %v712
    %v714 = vld [vmem:[#allocation8] sm:$0xf]
    %v715 = vld [vmem:[#allocation8 + $0x4] sm:$0xf]
    %v716 = vld [vmem:[#allocation8 + $0x8] sm:$0xf]
    %v717 = vld [vmem:[#allocation8 + $0xc] sm:$0xf]
    %v718 = vld [vmem:[#allocation8 + $0x10] sm:$0xf]
    %v719 = vld [vmem:[#allocation8 + $0x14] sm:$0xf]
    %v720 = vld [vmem:[#allocation8 + $0x18] sm:$0xf]
    %v721 = vld [vmem:[#allocation8 + $0x1c] sm:$0xf]
    %v722 = vld [vmem:[#allocation8 + $0x20] sm:$0xf]
    %v723 = vld [vmem:[#allocation8 + $0x24] sm:$0xf]
    %v724 = vld [vmem:[#allocation8 + $0x28] sm:$0xf]
    %v725 = vld [vmem:[#allocation8 + $0x2c] sm:$0xf]
    %v726 = vld [vmem:[#allocation8 + $0x30] sm:$0xf]
    %v727 = vld [vmem:[#allocation8 + $0x34] sm:$0xf]
    %v728 = vld [vmem:[#allocation8 + $0x38] sm:$0xf]
    %v729 = vld [vmem:[#allocation8 + $0x3c] sm:$0xf]
    %v730 = vld [vmem:[%s6] sm:$0x1]
    %v732 = vperm.slane %v730, 0
    %v750 = vunpack.c.l.b16 %v714
    %v751 = vunpack.c.l.b16 %v715
    %v752 = vunpack.c.l.b16 %v716
    %v753 = vunpack.c.l.b16 %v717
    %v754 = vunpack.c.l.b16 %v718
    %v755 = vunpack.c.l.b16 %v719
    %v756 = vunpack.c.l.b16 %v720
    %v757 = vunpack.c.l.b16 %v721
    %v758 = vunpack.c.l.b16 %v722
    %v759 = vunpack.c.l.b16 %v723
    %v760 = vunpack.c.l.b16 %v724
    %v761 = vunpack.c.l.b16 %v725
    %v762 = vunpack.c.l.b16 %v726
    %v763 = vunpack.c.l.b16 %v727
    %v764 = vunpack.c.l.b16 %v728
    %v765 = vunpack.c.l.b16 %v729
    %v766 = vpack.c.b16 %v751, %v750
    %v767 = vpack.c.b16 %v753, %v752
    %v768 = vpack.c.b16 %v755, %v754
    %v769 = vpack.c.b16 %v757, %v756
    %v770 = vpack.c.b16 %v759, %v758
    %v771 = vpack.c.b16 %v761, %v760
    %v772 = vpack.c.b16 %v763, %v762
    %v773 = vpack.c.b16 %v765, %v764
    %782 = vmatpush.bf16.msra.mxu0 %v773
    %783 = vmatpush.bf16.msra.mxu0 %v772
    %784 = vmatpush.bf16.msra.mxu0 %v771
    %785 = vmatpush.bf16.msra.mxu0 %v770
    %786 = vmatpush.bf16.msra.mxu0 %v769
    %787 = vmatpush.bf16.msra.mxu0 %v768
    %788 = vmatpush.bf16.msra.mxu0 %v767
    %789 = vmatpush.bf16.msra.mxu0 %v766
    %790 = vmatmul.bf16.gmra.mxu0 %v713
    %v791 = vpop.f32.mrf.mxu0
    %v792 = vadd.f32 %v732, %v791
    %v793 = vpop.f32.mrf.mxu0
    %794 = vdwg.mxu0
    %v795 = vmax.f32 %v792, 0.0
    %v796 = vpack.c.bf16 %v795, %v795
    %v797 = vld [vmem:[#allocation10] sm:$0xf]
    %v798 = vld [vmem:[#allocation10 + $0x4] sm:$0xf]
    %v799 = vld [vmem:[#allocation10 + $0x8] sm:$0xf]
    %v800 = vld [vmem:[#allocation10 + $0xc] sm:$0xf]
    %v801 = vld [vmem:[#allocation10 + $0x10] sm:$0xf]
    %v802 = vld [vmem:[#allocation10 + $0x14] sm:$0xf]
    %v803 = vld [vmem:[#allocation10 + $0x18] sm:$0xf]
    %v804 = vld [vmem:[#allocation10 + $0x1c] sm:$0xf]
    %v805 = vld [vmem:[#allocation10 + $0x20] sm:$0xf]
    %v806 = vld [vmem:[#allocation10 + $0x24] sm:$0xf]
    %v807 = vld [vmem:[#allocation10 + $0x28] sm:$0xf]
    %v808 = vld [vmem:[#allocation10 + $0x2c] sm:$0xf]
    %v809 = vld [vmem:[#allocation10 + $0x30] sm:$0xf]
    %v810 = vld [vmem:[#allocation10 + $0x34] sm:$0xf]
    %v811 = vld [vmem:[#allocation10 + $0x38] sm:$0xf]
    %v812 = vld [vmem:[#allocation10 + $0x3c] sm:$0xf]
    %v813 = vld [vmem:[%s8] sm:$0x1]
    %v815 = vperm.slane %v813, 0
    %v833 = vunpack.c.l.b16 %v797
    %v834 = vunpack.c.l.b16 %v798
    %v835 = vunpack.c.l.b16 %v799
    %v836 = vunpack.c.l.b16 %v800
    %v837 = vunpack.c.l.b16 %v801
    %v838 = vunpack.c.l.b16 %v802
    %v839 = vunpack.c.l.b16 %v803
    %v840 = vunpack.c.l.b16 %v804
    %v841 = vunpack.c.l.b16 %v805
    %v842 = vunpack.c.l.b16 %v806
    %v843 = vunpack.c.l.b16 %v807
    %v844 = vunpack.c.l.b16 %v808
    %v845 = vunpack.c.l.b16 %v809
    %v846 = vunpack.c.l.b16 %v810
    %v847 = vunpack.c.l.b16 %v811
    %v848 = vunpack.c.l.b16 %v812
    %v849 = vpack.c.b16 %v834, %v833
    %v850 = vpack.c.b16 %v836, %v835
    %v851 = vpack.c.b16 %v838, %v837
    %v852 = vpack.c.b16 %v840, %v839
    %v853 = vpack.c.b16 %v842, %v841
    %v854 = vpack.c.b16 %v844, %v843
    %v855 = vpack.c.b16 %v846, %v845
    %v856 = vpack.c.b16 %v848, %v847
    %865 = vmatpush.bf16.msra.mxu0 %v856
    %866 = vmatpush.bf16.msra.mxu0 %v855
    %867 = vmatpush.bf16.msra.mxu0 %v854
    %868 = vmatpush.bf16.msra.mxu0 %v853
    %869 = vmatpush.bf16.msra.mxu0 %v852
    %870 = vmatpush.bf16.msra.mxu0 %v851
    %871 = vmatpush.bf16.msra.mxu0 %v850
    %872 = vmatpush.bf16.msra.mxu0 %v849
    %873 = vmatmul.bf16.gmra.mxu0 %v796
    %v874 = vpop.f32.mrf.mxu0
    %v875 = vadd.f32 %v815, %v874
    %v876 = vpop.f32.mrf.mxu0
    %877 = vdwg.mxu0
    %878 = vmax.xlane.f32.xlu0 %v875
    %v879 = vpop.xlane.xlu0 %878
    %v880 = vsub.f32 %v875, %v879
    %v881 = vmul.f32 %v880, 1.442695
    %v882 = vpow.pop %v881
    %883 = vadd.xlane.f32.xlu0 %v882
    %v884 = vpop.xlane.xlu0 %883
    %v885 = vlog2.pop %v884
    %v886 = vmul.f32 %v885, 0.6931472
    %v887 = vsub.f32 %v880, %v886
    %vm888 = vcmask 80896
    %889 = vst.msk [vmem:[#allocation11] sm:$0xff] %vm888, %v887
    // Predicated region
    $region58: #{tpu_custom_call.1} parent=1 // pred_check
      _
    $region59: #{tpu_custom_call.1} parent=1 // pred_check_branch
      %891 = sbr.rel (0) target = $region61
    $region60: #{tpu_custom_call.1} parent=1 // pred_region
      %893 = vsyncadd [#allocation4], 0
      %s895 = sshll.u32 [#allocation11], 4
      %s896 = int_to_ptr.vmem [resolvable:$true] %s895
      %s897 = sshll.u32 %s9, 4
      %s898 = int_to_ptr.hbm [resolvable:$true] %s897
      %900 = dma.vmem_to_hbm [thread:$0]  %s896, 128, %s898, [#allocation4]
    $region61: #{tpu_custom_call.1} parent=1 // pred_fallthru
      _
    // Predicated region
    $region62: #{tpu_custom_call.1} parent=1 // pred_check
      _
    $region63: #{tpu_custom_call.1} parent=1 // pred_check_branch
      %902 = sbr.rel (0) target = $region65
    $region64: #{tpu_custom_call.1} parent=1 // pred_region
      %904 = dma.done [#allocation4], 128
    $region65: #{tpu_custom_call.1} parent=1 // pred_fallthru
      _
    %905 = vsyncpa [#allocation3], 1
    %906 = vsyncpa [#allocation6], 1
    %907 = vsyncpa [#allocation9], 1
    %908 = vsyncpa [#allocation4], 1

// kernel: tpu_custom_call.1
$region0: #{tpu_custom_call.1}
  #allocation0 [shape = 'u32[]', space=smem, size = 0x4, offset = 0x4, fixed_abs, tag = 'smem constant byte address 0x4 - core index']
  #allocation1 [shape = 'u32[72,128]{1,0:T(1,128)}', space=vmem, size = 0x9000, scoped, tag = 'internal scratch']
  %s0 = inlined_call_operand.hbm [shape: bf16[8,784], index: 0, kind: input, shape index: {}]
  %s1 = inlined_call_operand.hbm [shape: bf16[784,128], index: 1, kind: input, shape index: {}]
  %s2 = inlined_call_operand.vmem [shape: f32[1,128], index: 2, kind: input, shape index: {}]
  %s3 = inlined_call_operand.hbm [shape: bf16[128,128], index: 3, kind: input, shape index: {}]
  %s4 = inlined_call_operand.vmem [shape: f32[1,128], index: 4, kind: input, shape index: {}]
  %s5 = inlined_call_operand.hbm [shape: bf16[128,128], index: 5, kind: input, shape index: {}]
  %s6 = inlined_call_operand.vmem [shape: f32[1,128], index: 6, kind: input, shape index: {}]
  %s7 = inlined_call_operand.hbm [shape: bf16[128,128], index: 7, kind: input, shape index: {}]
  %s8 = inlined_call_operand.vmem [shape: f32[1,128], index: 8, kind: input, shape index: {}]
  %s9 = inlined_call_operand.hbm [shape: f32[8,10], index: 9, kind: output, shape index: {}]
  %s10 = sld [smem:[#allocation0]]
  $region66: #{tpu_custom_call.1} parent=0
    _
  %s12 = ssub.s32 1, %s10
  %s13 = scalar_select 0, %s12, %s10
  $region1: #{tpu_custom_call.1} parent=0
    #allocation2 [shape = 'u8[14336]{0}', space=vmem, size = 0x3800, scoped, tag = 'input window, operand 0, single buffered']
    #allocation3 [shape = 's32[1]{0}', space=sflag, size = 0x4, scoped, tag = 'scoped memory for tpu_custom_call.1']
    #allocation4 [shape = 's32[1]{0}', space=sflag, size = 0x4, scoped, tag = 'scoped memory for tpu_custom_call.1']
    #allocation5 [shape = 'u8[200704]{0}', space=vmem, size = 0x31000, scoped, tag = 'input window, operand 1, single buffered']
    #allocation6 [shape = 's32[1]{0}', space=sflag, size = 0x4, scoped, tag = 'scoped memory for tpu_custom_call.1']
    #allocation7 [shape = 'u8[32768]{0}', space=vmem, size = 0x8000, scoped, tag = 'input window, operand 3, single buffered']
    #allocation8 [shape = 'u8[32768]{0}', space=vmem, size = 0x8000, scoped, tag = 'input window, operand 5, single buffered']
    #allocation9 [shape = 's32[1]{0}', space=sflag, size = 0x4, scoped, tag = 'scoped memory for tpu_custom_call.1']
    #allocation10 [shape = 'u8[32768]{0}', space=vmem, size = 0x8000, scoped, tag = 'input window, operand 7, single buffered']
    #allocation11 [shape = 'u8[4096]{0}', space=vmem, size = 0x1000, scoped, tag = 'output window, operand 0, single buffered']
    %14 = vsyncpa [#allocation3], 0
    %15 = vsyncpa [#allocation6], 0
    %16 = vsyncpa [#allocation9], 0
    %17 = vsyncpa [#allocation4], 0
    // Predicated region
    $region2: #{tpu_custom_call.1} parent=1 // pred_check
      _
    $region3: #{tpu_custom_call.1} parent=1 // pred_check_branch
      %19 = sbr.rel (0) target = $region5
    $region4: #{tpu_custom_call.1} parent=1 // pred_region
      %21 = vsyncadd [#allocation3], 0
      %s23 = sshll.u32 %s0, 4
      %s24 = int_to_ptr.hbm [resolvable:$true] %s23
      %s25 = sshll.u32 [#allocation2], 4
      %s26 = int_to_ptr.vmem [resolvable:$true] %s25
      %28 = dma.hbm_to_vmem [thread:$0]  %s24, 448, %s26, [#allocation3]
    $region5: #{tpu_custom_call.1} parent=1 // pred_fallthru
      _
    // Predicated region
    $region6: #{tpu_custom_call.1} parent=1 // pred_check
      _
    $region7: #{tpu_custom_call.1} parent=1 // pred_check_branch
      %30 = sbr.rel (0) target = $region9
    $region8: #{tpu_custom_call.1} parent=1 // pred_region
      %32 = vsyncadd [#allocation6], 0
      %s33 = sshll.u32 %s1, 4
      %s34 = int_to_ptr.hbm [resolvable:$true] %s33
      %s35 = sshll.u32 [#allocation5], 4
      %s36 = int_to_ptr.vmem [resolvable:$true] %s35
      %41 = dma.hbm_to_vmem [thread:$0]  %s34, 6272, %s36, [#allocation6], 64, 64, 4
    $region9: #{tpu_custom_call.1} parent=1 // pred_fallthru
      _
    // Predicated region
    $region10: #{tpu_custom_call.1} parent=1 // pred_check
      _
    $region11: #{tpu_custom_call.1} parent=1 // pred_check_branch
      %43 = sbr.rel (0) target = $region13
    $region12: #{tpu_custom_call.1} parent=1 // pred_region
      _
    $region13: #{tpu_custom_call.1} parent=1 // pred_fallthru
      _
    // Predicated region
    $region14: #{tpu_custom_call.1} parent=1 // pred_check
      _
    $region15: #{tpu_custom_call.1} parent=1 // pred_check_branch
      %45 = sbr.rel (0) target = $region17
    $region16: #{tpu_custom_call.1} parent=1 // pred_region
      %47 = vsyncadd [#allocation6], 0
      %s48 = sshll.u32 %s3, 4
      %s49 = int_to_ptr.hbm [resolvable:$true] %s48
      %s50 = sshll.u32 [#allocation7], 4
      %s51 = int_to_ptr.vmem [resolvable:$true] %s50
      %56 = dma.hbm_to_vmem [thread:$0]  %s49, 1024, %s51, [#allocation6], 64, 64, 4
    $region17: #{tpu_custom_call.1} parent=1 // pred_fallthru
      _
    // Predicated region
    $region18: #{tpu_custom_call.1} parent=1 // pred_check
      _
    $region19: #{tpu_custom_call.1} parent=1 // pred_check_branch
      %58 = sbr.rel (0) target = $region21
    $region20: #{tpu_custom_call.1} parent=1 // pred_region
      _
    $region21: #{tpu_custom_call.1} parent=1 // pred_fallthru
      _
    // Predicated region
    $region22: #{tpu_custom_call.1} parent=1 // pred_check
      _
    $region23: #{tpu_custom_call.1} parent=1 // pred_check_branch
      %60 = sbr.rel (0) target = $region25
    $region24: #{tpu_custom_call.1} parent=1 // pred_region
      %62 = vsyncadd [#allocation9], 0
      %s63 = sshll.u32 %s5, 4
      %s64 = int_to_ptr.hbm [resolvable:$true] %s63
      %s65 = sshll.u32 [#allocation8], 4
      %s66 = int_to_ptr.vmem [resolvable:$true] %s65
      %71 = dma.hbm_to_vmem [thread:$0]  %s64, 1024, %s66, [#allocation9], 64, 64, 4
    $region25: #{tpu_custom_call.1} parent=1 // pred_fallthru
      _
    // Predicated region
    $region26: #{tpu_custom_call.1} parent=1 // pred_check
      _
    $region27: #{tpu_custom_call.1} parent=1 // pred_check_branch
      %73 = sbr.rel (0) target = $region29
    $region28: #{tpu_custom_call.1} parent=1 // pred_region
      _
    $region29: #{tpu_custom_call.1} parent=1 // pred_fallthru
      _
    // Predicated region
    $region30: #{tpu_custom_call.1} parent=1 // pred_check
      _
    $region31: #{tpu_custom_call.1} parent=1 // pred_check_branch
      %75 = sbr.rel (0) target = $region33
    $region32: #{tpu_custom_call.1} parent=1 // pred_region
      %77 = vsyncadd [#allocation9], 0
      %s78 = sshll.u32 %s7, 4
      %s79 = int_to_ptr.hbm [resolvable:$true] %s78
      %s80 = sshll.u32 [#allocation10], 4
      %s81 = int_to_ptr.vmem [resolvable:$true] %s80
      %86 = dma.hbm_to_vmem [thread:$0]  %s79, 1024, %s81, [#allocation9], 64, 64, 4
    $region33: #{tpu_custom_call.1} parent=1 // pred_fallthru
      _
    // Predicated region
    $region34: #{tpu_custom_call.1} parent=1 // pred_check
      _
    $region35: #{tpu_custom_call.1} parent=1 // pred_check_branch
      %88 = sbr.rel (0) target = $region37
    $region36: #{tpu_custom_call.1} parent=1 // pred_region
      _
    $region37: #{tpu_custom_call.1} parent=1 // pred_fallthru
      _
    // Predicated region
    $region38: #{tpu_custom_call.1} parent=1 // pred_check
      _
    $region39: #{tpu_custom_call.1} parent=1 // pred_check_branch
      %90 = sbr.rel (0) target = $region41
    $region40: #{tpu_custom_call.1} parent=1 // pred_region
      %92 = dma.done [#allocation3], 448
    $region41: #{tpu_custom_call.1} parent=1 // pred_fallthru
      _
    // Predicated region
    $region42: #{tpu_custom_call.1} parent=1 // pred_check
      _
    $region43: #{tpu_custom_call.1} parent=1 // pred_check_branch
      %94 = sbr.rel (0) target = $region45
    $region44: #{tpu_custom_call.1} parent=1 // pred_region
      %96 = dma.done [#allocation6], 6272
    $region45: #{tpu_custom_call.1} parent=1 // pred_fallthru
      _
    // Predicated region
    $region46: #{tpu_custom_call.1} parent=1 // pred_check
      _
    $region47: #{tpu_custom_call.1} parent=1 // pred_check_branch
      %98 = sbr.rel (0) target = $region49
    $region48: #{tpu_custom_call.1} parent=1 // pred_region
      %100 = dma.done [#allocation6], 1024
    $region49: #{tpu_custom_call.1} parent=1 // pred_fallthru
      _
    // Predicated region
    $region50: #{tpu_custom_call.1} parent=1 // pred_check
      _
    $region51: #{tpu_custom_call.1} parent=1 // pred_check_branch
      %102 = sbr.rel (0) target = $region53
    $region52: #{tpu_custom_call.1} parent=1 // pred_region
      %104 = dma.done [#allocation9], 1024
    $region53: #{tpu_custom_call.1} parent=1 // pred_fallthru
      _
    // Predicated region
    $region54: #{tpu_custom_call.1} parent=1 // pred_check
      _
    $region55: #{tpu_custom_call.1} parent=1 // pred_check_branch
      %106 = sbr.rel (0) target = $region57
    $region56: #{tpu_custom_call.1} parent=1 // pred_region
      %108 = dma.done [#allocation9], 1024
    $region57: #{tpu_custom_call.1} parent=1 // pred_fallthru
      _
    %v110 = vld [vmem:[#allocation2] sm:$0xff]
    %v111 = vld [vmem:[#allocation2 + $0x8] sm:$0xff]
    %v112 = vld [vmem:[#allocation2 + $0x10] sm:$0xff]
    %v113 = vld [vmem:[#allocation2 + $0x18] sm:$0xf]
    %v114 = vld [vmem:[#allocation5] sm:$0xf]
    %v115 = vld [vmem:[#allocation5 + $0x4] sm:$0xf]
    %v116 = vld [vmem:[#allocation5 + $0x8] sm:$0xf]
    %v117 = vld [vmem:[#allocation5 + $0xc] sm:$0xf]
    %v118 = vld [vmem:[#allocation5 + $0x10] sm:$0xf]
    %v119 = vld [vmem:[#allocation5 + $0x14] sm:$0xf]
    %v120 = vld [vmem:[#allocation5 + $0x18] sm:$0xf]
    %v121 = vld [vmem:[#allocation5 + $0x1c] sm:$0xf]
    %v122 = vld [vmem:[#allocation5 + $0x20] sm:$0xf]
    %v123 = vld [vmem:[#allocation5 + $0x24] sm:$0xf]
    %v124 = vld [vmem:[#allocation5 + $0x28] sm:$0xf]
    %v125 = vld [vmem:[#allocation5 + $0x2c] sm:$0xf]
    %v126 = vld [vmem:[#allocation5 + $0x30] sm:$0xf]
    %v127 = vld [vmem:[#allocation5 + $0x34] sm:$0xf]
    %v128 = vld [vmem:[#allocation5 + $0x38] sm:$0xf]
    %v129 = vld [vmem:[#allocation5 + $0x3c] sm:$0xf]
    %v130 = vld [vmem:[#allocation5 + $0x40] sm:$0xf]
    %v131 = vld [vmem:[#allocation5 + $0x44] sm:$0xf]
    %v132 = vld [vmem:[#allocation5 + $0x48] sm:$0xf]
    %v133 = vld [vmem:[#allocation5 + $0x4c] sm:$0xf]
    %v134 = vld [vmem:[#allocation5 + $0x50] sm:$0xf]
    %v135 = vld [vmem:[#allocation5 + $0x54] sm:$0xf]
    %v136 = vld [vmem:[#allocation5 + $0x58] sm:$0xf]
    %v137 = vld [vmem:[#allocation5 + $0x5c] sm:$0xf]
    %v138 = vld [vmem:[#allocation5 + $0x60] sm:$0xf]
    %v139 = vld [vmem:[#allocation5 + $0x64] sm:$0xf]
    %v140 = vld [vmem:[#allocation5 + $0x68] sm:$0xf]
    %v141 = vld [vmem:[#allocation5 + $0x6c] sm:$0xf]
    %v142 = vld [vmem:[#allocation5 + $0x70] sm:$0xf]
    %v143 = vld [vmem:[#allocation5 + $0x74] sm:$0xf]
    %v144 = vld [vmem:[#allocation5 + $0x78] sm:$0xf]
    %v145 = vld [vmem:[#allocation5 + $0x7c] sm:$0xf]
    %v146 = vld [vmem:[#allocation5 + $0x80] sm:$0xf]
    %v147 = vld [vmem:[#allocation5 + $0x84] sm:$0xf]
    %v148 = vld [vmem:[#allocation5 + $0x88] sm:$0xf]
    %v149 = vld [vmem:[#allocation5 + $0x8c] sm:$0xf]
    %v150 = vld [vmem:[#allocation5 + $0x90] sm:$0xf]
    %v151 = vld [vmem:[#allocation5 + $0x94] sm:$0xf]
    %v152 = vld [vmem:[#allocation5 + $0x98] sm:$0xf]
    %v153 = vld [vmem:[#allocation5 + $0x9c] sm:$0xf]
    %v154 = vld [vmem:[#allocation5 + $0xa0] sm:$0xf]
    %v155 = vld [vmem:[#allocation5 + $0xa4] sm:$0xf]
    %v156 = vld [vmem:[#allocation5 + $0xa8] sm:$0xf]
    %v157 = vld [vmem:[#allocation5 + $0xac] sm:$0xf]
    %v158 = vld [vmem:[#allocation5 + $0xb0] sm:$0xf]
    %v159 = vld [vmem:[#allocation5 + $0xb4] sm:$0xf]
    %v160 = vld [vmem:[#allocation5 + $0xb8] sm:$0xf]
    %v161 = vld [vmem:[#allocation5 + $0xbc] sm:$0xf]
    %v162 = vld [vmem:[#allocation5 + $0xc0] sm:$0xf]
    %v163 = vld [vmem:[#allocation5 + $0xc4] sm:$0xf]
    %v164 = vld [vmem:[#allocation5 + $0xc8] sm:$0xf]
    %v165 = vld [vmem:[#allocation5 + $0xcc] sm:$0xf]
    %v166 = vld [vmem:[#allocation5 + $0xd0] sm:$0xf]
    %v167 = vld [vmem:[#allocation5 + $0xd4] sm:$0xf]
    %v168 = vld [vmem:[#allocation5 + $0xd8] sm:$0xf]
    %v169 = vld [vmem:[#allocation5 + $0xdc] sm:$0xf]
    %v170 = vld [vmem:[#allocation5 + $0xe0] sm:$0xf]
    %v171 = vld [vmem:[#allocation5 + $0xe4] sm:$0xf]
    %v172 = vld [vmem:[#allocation5 + $0xe8] sm:$0xf]
    %v173 = vld [vmem:[#allocation5 + $0xec] sm:$0xf]
    %v174 = vld [vmem:[#allocation5 + $0xf0] sm:$0xf]
    %v175 = vld [vmem:[#allocation5 + $0xf4] sm:$0xf]
    %v176 = vld [vmem:[#allocation5 + $0xf8] sm:$0xf]
    %v177 = vld [vmem:[#allocation5 + $0xfc] sm:$0xf]
    %v178 = vld [vmem:[#allocation5 + $0x100] sm:$0xf]
    %v179 = vld [vmem:[#allocation5 + $0x104] sm:$0xf]
    %v180 = vld [vmem:[#allocation5 + $0x108] sm:$0xf]
    %v181 = vld [vmem:[#allocation5 + $0x10c] sm:$0xf]
    %v182 = vld [vmem:[#allocation5 + $0x110] sm:$0xf]
    %v183 = vld [vmem:[#allocation5 + $0x114] sm:$0xf]
    %v184 = vld [vmem:[#allocation5 + $0x118] sm:$0xf]
    %v185 = vld [vmem:[#allocation5 + $0x11c] sm:$0xf]
    %v186 = vld [vmem:[#allocation5 + $0x120] sm:$0xf]
    %v187 = vld [vmem:[#allocation5 + $0x124] sm:$0xf]
    %v188 = vld [vmem:[#allocation5 + $0x128] sm:$0xf]
    %v189 = vld [vmem:[#allocation5 + $0x12c] sm:$0xf]
    %v190 = vld [vmem:[#allocation5 + $0x130] sm:$0xf]
    %v191 = vld [vmem:[#allocation5 + $0x134] sm:$0xf]
    %v192 = vld [vmem:[#allocation5 + $0x138] sm:$0xf]
    %v193 = vld [vmem:[#allocation5 + $0x13c] sm:$0xf]
    %v194 = vld [vmem:[#allocation5 + $0x140] sm:$0xf]
    %v195 = vld [vmem:[#allocation5 + $0x144] sm:$0xf]
    %v196 = vld [vmem:[#allocation5 + $0x148] sm:$0xf]
    %v197 = vld [vmem:[#allocation5 + $0x14c] sm:$0xf]
    %v198 = vld [vmem:[#allocation5 + $0x150] sm:$0xf]
    %v199 = vld [vmem:[#allocation5 + $0x154] sm:$0xf]
    %v200 = vld [vmem:[#allocation5 + $0x158] sm:$0xf]
    %v201 = vld [vmem:[#allocation5 + $0x15c] sm:$0xf]
    %v202 = vld [vmem:[#allocation5 + $0x160] sm:$0xf]
    %v203 = vld [vmem:[#allocation5 + $0x164] sm:$0xf]
    %v204 = vld [vmem:[#allocation5 + $0x168] sm:$0xf]
    %v205 = vld [vmem:[#allocation5 + $0x16c] sm:$0xf]
    %v206 = vld [vmem:[#allocation5 + $0x170] sm:$0xf]
    %v207 = vld [vmem:[#allocation5 + $0x174] sm:$0xf]
    %v208 = vld [vmem:[#allocation5 + $0x178] sm:$0xf]
    %v209 = vld [vmem:[#allocation5 + $0x17c] sm:$0xf]
    %v210 = vld [vmem:[#allocation5 + $0x180] sm:$0xf]
    %v211 = vld [vmem:[#allocation5 + $0x184] sm:$0xf]
    %v212 = vld [vmem:[%s2] sm:$0x1]
    %v214 = vperm.slane %v212, 0
    %v220 = vunpack.c.l.b16 %v110
    %v221 = vunpack.c.h.b16 %v110
    %v222 = vunpack.c.l.b16 %v111
    %v223 = vunpack.c.h.b16 %v111
    %v224 = vunpack.c.l.b16 %v112
    %v225 = vunpack.c.h.b16 %v112
    %v226 = vunpack.c.l.b16 %v113
    %v227 = vpack.c.b16 %v220, %v220
    %v228 = vpack.c.b16 %v221, %v221
    %v229 = vpack.c.b16 %v222, %v222
    %v230 = vpack.c.b16 %v223, %v223
    %v231 = vpack.c.b16 %v224, %v224
    %v232 = vpack.c.b16 %v225, %v225
    %v233 = vpack.c.b16 %v226, %v226
    %v338 = vunpack.c.l.b16 %v114
    %v339 = vunpack.c.l.b16 %v115
    %v340 = vunpack.c.l.b16 %v116
    %v341 = vunpack.c.l.b16 %v117
    %v342 = vunpack.c.l.b16 %v118
    %v343 = vunpack.c.l.b16 %v119
    %v344 = vunpack.c.l.b16 %v120
    %v345 = vunpack.c.l.b16 %v121
    %v346 = vunpack.c.l.b16 %v122
    %v347 = vunpack.c.l.b16 %v123
    %v348 = vunpack.c.l.b16 %v124
    %v349 = vunpack.c.l.b16 %v125
    %v350 = vunpack.c.l.b16 %v126
    %v351 = vunpack.c.l.b16 %v127
    %v352 = vunpack.c.l.b16 %v128
    %v353 = vunpack.c.l.b16 %v129
    %v354 = vunpack.c.l.b16 %v130
    %v355 = vunpack.c.l.b16 %v131
    %v356 = vunpack.c.l.b16 %v132
    %v357 = vunpack.c.l.b16 %v133
    %v358 = vunpack.c.l.b16 %v134
    %v359 = vunpack.c.l.b16 %v135
    %v360 = vunpack.c.l.b16 %v136
    %v361 = vunpack.c.l.b16 %v137
    %v362 = vunpack.c.l.b16 %v138
    %v363 = vunpack.c.l.b16 %v139
    %v364 = vunpack.c.l.b16 %v140
    %v365 = vunpack.c.l.b16 %v141
    %v366 = vunpack.c.l.b16 %v142
    %v367 = vunpack.c.l.b16 %v143
    %v368 = vunpack.c.l.b16 %v144
    %v369 = vunpack.c.l.b16 %v145
    %v370 = vunpack.c.l.b16 %v146
    %v371 = vunpack.c.l.b16 %v147
    %v372 = vunpack.c.l.b16 %v148
    %v373 = vunpack.c.l.b16 %v149
    %v374 = vunpack.c.l.b16 %v150
    %v375 = vunpack.c.l.b16 %v151
    %v376 = vunpack.c.l.b16 %v152
    %v377 = vunpack.c.l.b16 %v153
    %v378 = vunpack.c.l.b16 %v154
    %v379 = vunpack.c.l.b16 %v155
    %v380 = vunpack.c.l.b16 %v156
    %v381 = vunpack.c.l.b16 %v157
    %v382 = vunpack.c.l.b16 %v158
    %v383 = vunpack.c.l.b16 %v159
    %v384 = vunpack.c.l.b16 %v160
    %v385 = vunpack.c.l.b16 %v161
    %v386 = vunpack.c.l.b16 %v162
    %v387 = vunpack.c.l.b16 %v163
    %v388 = vunpack.c.l.b16 %v164
    %v389 = vunpack.c.l.b16 %v165
    %v390 = vunpack.c.l.b16 %v166
    %v391 = vunpack.c.l.b16 %v167
    %v392 = vunpack.c.l.b16 %v168
    %v393 = vunpack.c.l.b16 %v169
    %v394 = vunpack.c.l.b16 %v170
    %v395 = vunpack.c.l.b16 %v171
    %v396 = vunpack.c.l.b16 %v172
    %v397 = vunpack.c.l.b16 %v173
    %v398 = vunpack.c.l.b16 %v174
    %v399 = vunpack.c.l.b16 %v175
    %v400 = vunpack.c.l.b16 %v176
    %v401 = vunpack.c.l.b16 %v177
    %v402 = vunpack.c.l.b16 %v178
    %v403 = vunpack.c.l.b16 %v179
    %v404 = vunpack.c.l.b16 %v180
    %v405 = vunpack.c.l.b16 %v181
    %v406 = vunpack.c.l.b16 %v182
    %v407 = vunpack.c.l.b16 %v183
    %v408 = vunpack.c.l.b16 %v184
    %v409 = vunpack.c.l.b16 %v185
    %v410 = vunpack.c.l.b16 %v186
    %v411 = vunpack.c.l.b16 %v187
    %v412 = vunpack.c.l.b16 %v188
    %v413 = vunpack.c.l.b16 %v189
    %v414 = vunpack.c.l.b16 %v190
    %v415 = vunpack.c.l.b16 %v191
    %v416 = vunpack.c.l.b16 %v192
    %v417 = vunpack.c.l.b16 %v193
    %v418 = vunpack.c.l.b16 %v194
    %v419 = vunpack.c.l.b16 %v195
    %v420 = vunpack.c.l.b16 %v196
    %v421 = vunpack.c.l.b16 %v197
    %v422 = vunpack.c.l.b16 %v198
    %v423 = vunpack.c.l.b16 %v199
    %v424 = vunpack.c.l.b16 %v200
    %v425 = vunpack.c.l.b16 %v201
    %v426 = vunpack.c.l.b16 %v202
    %v427 = vunpack.c.l.b16 %v203
    %v428 = vunpack.c.l.b16 %v204
    %v429 = vunpack.c.l.b16 %v205
    %v430 = vunpack.c.l.b16 %v206
    %v431 = vunpack.c.l.b16 %v207
    %v432 = vunpack.c.l.b16 %v208
    %v433 = vunpack.c.l.b16 %v209
    %v434 = vunpack.c.l.b16 %v210
    %v435 = vunpack.c.l.b16 %v211
    %v436 = vpack.c.b16 %v339, %v338
    %v437 = vpack.c.b16 %v341, %v340
    %v438 = vpack.c.b16 %v343, %v342
    %v439 = vpack.c.b16 %v345, %v344
    %v440 = vpack.c.b16 %v347, %v346
    %v441 = vpack.c.b16 %v349, %v348
    %v442 = vpack.c.b16 %v351, %v350
    %v443 = vpack.c.b16 %v353, %v352
    %v444 = vpack.c.b16 %v355, %v354
    %v445 = vpack.c.b16 %v357, %v356
    %v446 = vpack.c.b16 %v359, %v358
    %v447 = vpack.c.b16 %v361, %v360
    %v448 = vpack.c.b16 %v363, %v362
    %v449 = vpack.c.b16 %v365, %v364
    %v450 = vpack.c.b16 %v367, %v366
    %v451 = vpack.c.b16 %v369, %v368
    %v452 = vpack.c.b16 %v371, %v370
    %v453 = vpack.c.b16 %v373, %v372
    %v454 = vpack.c.b16 %v375, %v374
    %v455 = vpack.c.b16 %v377, %v376
    %v456 = vpack.c.b16 %v379, %v378
    %v457 = vpack.c.b16 %v381, %v380
    %v458 = vpack.c.b16 %v383, %v382
    %v459 = vpack.c.b16 %v385, %v384
    %v460 = vpack.c.b16 %v387, %v386
    %v461 = vpack.c.b16 %v389, %v388
    %v462 = vpack.c.b16 %v391, %v390
    %v463 = vpack.c.b16 %v393, %v392
    %v464 = vpack.c.b16 %v395, %v394
    %v465 = vpack.c.b16 %v397, %v396
    %v466 = vpack.c.b16 %v399, %v398
    %v467 = vpack.c.b16 %v401, %v400
    %v468 = vpack.c.b16 %v403, %v402
    %v469 = vpack.c.b16 %v405, %v404
    %v470 = vpack.c.b16 %v407, %v406
    %v471 = vpack.c.b16 %v409, %v408
    %v472 = vpack.c.b16 %v411, %v410
    %v473 = vpack.c.b16 %v413, %v412
    %v474 = vpack.c.b16 %v415, %v414
    %v475 = vpack.c.b16 %v417, %v416
    %v476 = vpack.c.b16 %v419, %v418
    %v477 = vpack.c.b16 %v421, %v420
    %v478 = vpack.c.b16 %v423, %v422
    %v479 = vpack.c.b16 %v425, %v424
    %v480 = vpack.c.b16 %v427, %v426
    %v481 = vpack.c.b16 %v429, %v428
    %v482 = vpack.c.b16 %v431, %v430
    %v483 = vpack.c.b16 %v433, %v432
    %v484 = vpack.c.b16 %v435, %v434
    %vm534 = vcmask 130048
    %v536 = vsel %vm534, %v233, 0
    %538 = vmatpush.bf16.msra.mxu0 %v443
    %539 = vmatpush.bf16.msra.mxu0 %v442
    %540 = vmatpush.bf16.msra.mxu0 %v441
    %541 = vmatpush.bf16.msra.mxu0 %v440
    %542 = vmatpush.bf16.msra.mxu0 %v439
    %543 = vmatpush.bf16.msra.mxu0 %v438
    %544 = vmatpush.bf16.msra.mxu0 %v437
    %545 = vmatpush.bf16.msra.mxu0 %v436
    %546 = vmatmul.bf16.gmra.mxu0 %v227
    %v547 = vpop.f32.mrf.mxu0
    %v548 = vadd.f32 %v214, %v547
    %v549 = vpop.f32.mrf.mxu0
    %550 = vdwg.mxu0
    %551 = vmatpush.bf16.msra.mxu0 %v451
    %552 = vmatpush.bf16.msra.mxu0 %v450
    %553 = vmatpush.bf16.msra.mxu0 %v449
    %554 = vmatpush.bf16.msra.mxu0 %v448
    %555 = vmatpush.bf16.msra.mxu0 %v447
    %556 = vmatpush.bf16.msra.mxu0 %v446
    %557 = vmatpush.bf16.msra.mxu0 %v445
    %558 = vmatpush.bf16.msra.mxu0 %v444
    %559 = vmatmul.bf16.gmra.mxu0 %v228
    %v560 = vpop.f32.mrf.mxu0
    %v561 = vadd.f32 %v548, %v560
    %v562 = vpop.f32.mrf.mxu0
    %563 = vdwg.mxu0
    %564 = vmatpush.bf16.msra.mxu0 %v459
    %565 = vmatpush.bf16.msra.mxu0 %v458
    %566 = vmatpush.bf16.msra.mxu0 %v457
    %567 = vmatpush.bf16.msra.mxu0 %v456
    %568 = vmatpush.bf16.msra.mxu0 %v455
    %569 = vmatpush.bf16.msra.mxu0 %v454
    %570 = vmatpush.bf16.msra.mxu0 %v453
    %571 = vmatpush.bf16.msra.mxu0 %v452
    %572 = vmatmul.bf16.gmra.mxu0 %v229
    %v573 = vpop.f32.mrf.mxu0
    %v574 = vadd.f32 %v561, %v573
    %v575 = vpop.f32.mrf.mxu0
    %576 = vdwg.mxu0
    %577 = vmatpush.bf16.msra.mxu0 %v467
    %578 = vmatpush.bf16.msra.mxu0 %v466
    %579 = vmatpush.bf16.msra.mxu0 %v465
    %580 = vmatpush.bf16.msra.mxu0 %v464
    %581 = vmatpush.bf16.msra.mxu0 %v463
    %582 = vmatpush.bf16.msra.mxu0 %v462
    %583 = vmatpush.bf16.msra.mxu0 %v461
    %584 = vmatpush.bf16.msra.mxu0 %v460
    %585 = vmatmul.bf16.gmra.mxu0 %v230
    %v586 = vpop.f32.mrf.mxu0
    %v587 = vadd.f32 %v574, %v586
    %v588 = vpop.f32.mrf.mxu0
    %589 = vdwg.mxu0
    %590 = vmatpush.bf16.msra.mxu0 %v475
    %591 = vmatpush.bf16.msra.mxu0 %v474
    %592 = vmatpush.bf16.msra.mxu0 %v473
    %593 = vmatpush.bf16.msra.mxu0 %v472
    %594 = vmatpush.bf16.msra.mxu0 %v471
    %595 = vmatpush.bf16.msra.mxu0 %v470
    %596 = vmatpush.bf16.msra.mxu0 %v469
    %597 = vmatpush.bf16.msra.mxu0 %v468
    %598 = vmatmul.bf16.gmra.mxu0 %v231
    %v599 = vpop.f32.mrf.mxu0
    %v600 = vadd.f32 %v587, %v599
    %v601 = vpop.f32.mrf.mxu0
    %602 = vdwg.mxu0
    %603 = vmatpush.bf16.msra.mxu0 %v483
    %604 = vmatpush.bf16.msra.mxu0 %v482
    %605 = vmatpush.bf16.msra.mxu0 %v481
    %606 = vmatpush.bf16.msra.mxu0 %v480
    %607 = vmatpush.bf16.msra.mxu0 %v479
    %608 = vmatpush.bf16.msra.mxu0 %v478
    %609 = vmatpush.bf16.msra.mxu0 %v477
    %610 = vmatpush.bf16.msra.mxu0 %v476
    %611 = vmatmul.bf16.gmra.mxu0 %v232
    %v612 = vpop.f32.mrf.mxu0
    %v613 = vadd.f32 %v600, %v612
    %v614 = vpop.f32.mrf.mxu0
    %615 = vdwg.mxu0
    %616 = vmatpush.bf16.msra.mxu0 0
    %617 = vmatpush.bf16.msra.mxu0 0
    %618 = vmatpush.bf16.msra.mxu0 0
    %619 = vmatpush.bf16.msra.mxu0 0
    %620 = vmatpush.bf16.msra.mxu0 0
    %621 = vmatpush.bf16.msra.mxu0 0
    %622 = vmatpush.bf16.msra.mxu0 0
    %623 = vmatpush.bf16.msra.mxu0 %v484
    %624 = vmatmul.bf16.gmra.mxu0 %v536
    %v625 = vpop.f32.mrf.mxu0
    %v626 = vadd.f32 %v613, %v625
    %v627 = vpop.f32.mrf.mxu0
    %628 = vdwg.mxu0
    %v629 = vmax.f32 %v626, 0.0
    %v630 = vpack.c.bf16 %v629, %v629
    %v631 = vld [vmem:[#allocation7] sm:$0xf]
    %v632 = vld [vmem:[#allocation7 + $0x4] sm:$0xf]
    %v633 = vld [vmem:[#allocation7 + $0x8] sm:$0xf]
    %v634 = vld [vmem:[#allocation7 + $0xc] sm:$0xf]
    %v635 = vld [vmem:[#allocation7 + $0x10] sm:$0xf]
    %v636 = vld [vmem:[#allocation7 + $0x14] sm:$0xf]
    %v637 = vld [vmem:[#allocation7 + $0x18] sm:$0xf]
    %v638 = vld [vmem:[#allocation7 + $0x1c] sm:$0xf]
    %v639 = vld [vmem:[#allocation7 + $0x20] sm:$0xf]
    %v640 = vld [vmem:[#allocation7 + $0x24] sm:$0xf]
    %v641 = vld [vmem:[#allocation7 + $0x28] sm:$0xf]
    %v642 = vld [vmem:[#allocation7 + $0x2c] sm:$0xf]
    %v643 = vld [vmem:[#allocation7 + $0x30] sm:$0xf]
    %v644 = vld [vmem:[#allocation7 + $0x34] sm:$0xf]
    %v645 = vld [vmem:[#allocation7 + $0x38] sm:$0xf]
    %v646 = vld [vmem:[#allocation7 + $0x3c] sm:$0xf]
    %v647 = vld [vmem:[%s4] sm:$0x1]
    %v649 = vperm.slane %v647, 0
    %v667 = vunpack.c.l.b16 %v631
    %v668 = vunpack.c.l.b16 %v632
    %v669 = vunpack.c.l.b16 %v633
    %v670 = vunpack.c.l.b16 %v634
    %v671 = vunpack.c.l.b16 %v635
    %v672 = vunpack.c.l.b16 %v636
    %v673 = vunpack.c.l.b16 %v637
    %v674 = vunpack.c.l.b16 %v638
    %v675 = vunpack.c.l.b16 %v639
    %v676 = vunpack.c.l.b16 %v640
    %v677 = vunpack.c.l.b16 %v641
    %v678 = vunpack.c.l.b16 %v642
    %v679 = vunpack.c.l.b16 %v643
    %v680 = vunpack.c.l.b16 %v644
    %v681 = vunpack.c.l.b16 %v645
    %v682 = vunpack.c.l.b16 %v646
    %v683 = vpack.c.b16 %v668, %v667
    %v684 = vpack.c.b16 %v670, %v669
    %v685 = vpack.c.b16 %v672, %v671
    %v686 = vpack.c.b16 %v674, %v673
    %v687 = vpack.c.b16 %v676, %v675
    %v688 = vpack.c.b16 %v678, %v677
    %v689 = vpack.c.b16 %v680, %v679
    %v690 = vpack.c.b16 %v682, %v681
    %699 = vmatpush.bf16.msra.mxu0 %v690
    %700 = vmatpush.bf16.msra.mxu0 %v689
    %701 = vmatpush.bf16.msra.mxu0 %v688
    %702 = vmatpush.bf16.msra.mxu0 %v687
    %703 = vmatpush.bf16.msra.mxu0 %v686
    %704 = vmatpush.bf16.msra.mxu0 %v685
    %705 = vmatpush.bf16.msra.mxu0 %v684
    %706 = vmatpush.bf16.msra.mxu0 %v683
    %707 = vmatmul.bf16.gmra.mxu0 %v630
    %v708 = vpop.f32.mrf.mxu0
    %v709 = vadd.f32 %v649, %v708
    %v710 = vpop.f32.mrf.mxu0
    %711 = vdwg.mxu0
    %v712 = vmax.f32 %v709, 0.0
    %v713 = vpack.c.bf16 %v712, %v712
    %v714 = vld [vmem:[#allocation8] sm:$0xf]
    %v715 = vld [vmem:[#allocation8 + $0x4] sm:$0xf]
    %v716 = vld [vmem:[#allocation8 + $0x8] sm:$0xf]
    %v717 = vld [vmem:[#allocation8 + $0xc] sm:$0xf]
    %v718 = vld [vmem:[#allocation8 + $0x10] sm:$0xf]
    %v719 = vld [vmem:[#allocation8 + $0x14] sm:$0xf]
    %v720 = vld [vmem:[#allocation8 + $0x18] sm:$0xf]
    %v721 = vld [vmem:[#allocation8 + $0x1c] sm:$0xf]
    %v722 = vld [vmem:[#allocation8 + $0x20] sm:$0xf]
    %v723 = vld [vmem:[#allocation8 + $0x24] sm:$0xf]
    %v724 = vld [vmem:[#allocation8 + $0x28] sm:$0xf]
    %v725 = vld [vmem:[#allocation8 + $0x2c] sm:$0xf]
    %v726 = vld [vmem:[#allocation8 + $0x30] sm:$0xf]
    %v727 = vld [vmem:[#allocation8 + $0x34] sm:$0xf]
    %v728 = vld [vmem:[#allocation8 + $0x38] sm:$0xf]
    %v729 = vld [vmem:[#allocation8 + $0x3c] sm:$0xf]
    %v730 = vld [vmem:[%s6] sm:$0x1]
    %v732 = vperm.slane %v730, 0
    %v750 = vunpack.c.l.b16 %v714
    %v751 = vunpack.c.l.b16 %v715
    %v752 = vunpack.c.l.b16 %v716
    %v753 = vunpack.c.l.b16 %v717
    %v754 = vunpack.c.l.b16 %v718
    %v755 = vunpack.c.l.b16 %v719
    %v756 = vunpack.c.l.b16 %v720
    %v757 = vunpack.c.l.b16 %v721
    %v758 = vunpack.c.l.b16 %v722
    %v759 = vunpack.c.l.b16 %v723
    %v760 = vunpack.c.l.b16 %v724
    %v761 = vunpack.c.l.b16 %v725
    %v762 = vunpack.c.l.b16 %v726
    %v763 = vunpack.c.l.b16 %v727
    %v764 = vunpack.c.l.b16 %v728
    %v765 = vunpack.c.l.b16 %v729
    %v766 = vpack.c.b16 %v751, %v750
    %v767 = vpack.c.b16 %v753, %v752
    %v768 = vpack.c.b16 %v755, %v754
    %v769 = vpack.c.b16 %v757, %v756
    %v770 = vpack.c.b16 %v759, %v758
    %v771 = vpack.c.b16 %v761, %v760
    %v772 = vpack.c.b16 %v763, %v762
    %v773 = vpack.c.b16 %v765, %v764
    %782 = vmatpush.bf16.msra.mxu0 %v773
    %783 = vmatpush.bf16.msra.mxu0 %v772
    %784 = vmatpush.bf16.msra.mxu0 %v771
    %785 = vmatpush.bf16.msra.mxu0 %v770
    %786 = vmatpush.bf16.msra.mxu0 %v769
    %787 = vmatpush.bf16.msra.mxu0 %v768
    %788 = vmatpush.bf16.msra.mxu0 %v767
    %789 = vmatpush.bf16.msra.mxu0 %v766
    %790 = vmatmul.bf16.gmra.mxu0 %v713
    %v791 = vpop.f32.mrf.mxu0
    %v792 = vadd.f32 %v732, %v791
    %v793 = vpop.f32.mrf.mxu0
    %794 = vdwg.mxu0
    %v795 = vmax.f32 %v792, 0.0
    %v796 = vpack.c.bf16 %v795, %v795
    %v797 = vld [vmem:[#allocation10] sm:$0xf]
    %v798 = vld [vmem:[#allocation10 + $0x4] sm:$0xf]
    %v799 = vld [vmem:[#allocation10 + $0x8] sm:$0xf]
    %v800 = vld [vmem:[#allocation10 + $0xc] sm:$0xf]
    %v801 = vld [vmem:[#allocation10 + $0x10] sm:$0xf]
    %v802 = vld [vmem:[#allocation10 + $0x14] sm:$0xf]
    %v803 = vld [vmem:[#allocation10 + $0x18] sm:$0xf]
    %v804 = vld [vmem:[#allocation10 + $0x1c] sm:$0xf]
    %v805 = vld [vmem:[#allocation10 + $0x20] sm:$0xf]
    %v806 = vld [vmem:[#allocation10 + $0x24] sm:$0xf]
    %v807 = vld [vmem:[#allocation10 + $0x28] sm:$0xf]
    %v808 = vld [vmem:[#allocation10 + $0x2c] sm:$0xf]
    %v809 = vld [vmem:[#allocation10 + $0x30] sm:$0xf]
    %v810 = vld [vmem:[#allocation10 + $0x34] sm:$0xf]
    %v811 = vld [vmem:[#allocation10 + $0x38] sm:$0xf]
    %v812 = vld [vmem:[#allocation10 + $0x3c] sm:$0xf]
    %v813 = vld [vmem:[%s8] sm:$0x1]
    %v815 = vperm.slane %v813, 0
    %v833 = vunpack.c.l.b16 %v797
    %v834 = vunpack.c.l.b16 %v798
    %v835 = vunpack.c.l.b16 %v799
    %v836 = vunpack.c.l.b16 %v800
    %v837 = vunpack.c.l.b16 %v801
    %v838 = vunpack.c.l.b16 %v802
    %v839 = vunpack.c.l.b16 %v803
    %v840 = vunpack.c.l.b16 %v804
    %v841 = vunpack.c.l.b16 %v805
    %v842 = vunpack.c.l.b16 %v806
    %v843 = vunpack.c.l.b16 %v807
    %v844 = vunpack.c.l.b16 %v808
    %v845 = vunpack.c.l.b16 %v809
    %v846 = vunpack.c.l.b16 %v810
    %v847 = vunpack.c.l.b16 %v811
    %v848 = vunpack.c.l.b16 %v812
    %v849 = vpack.c.b16 %v834, %v833
    %v850 = vpack.c.b16 %v836, %v835
    %v851 = vpack.c.b16 %v838, %v837
    %v852 = vpack.c.b16 %v840, %v839
    %v853 = vpack.c.b16 %v842, %v841
    %v854 = vpack.c.b16 %v844, %v843
    %v855 = vpack.c.b16 %v846, %v845
    %v856 = vpack.c.b16 %v848, %v847
    %865 = vmatpush.bf16.msra.mxu0 %v856
    %866 = vmatpush.bf16.msra.mxu0 %v855
    %867 = vmatpush.bf16.msra.mxu0 %v854
    %868 = vmatpush.bf16.msra.mxu0 %v853
    %869 = vmatpush.bf16.msra.mxu0 %v852
    %870 = vmatpush.bf16.msra.mxu0 %v851
    %871 = vmatpush.bf16.msra.mxu0 %v850
    %872 = vmatpush.bf16.msra.mxu0 %v849
    %873 = vmatmul.bf16.gmra.mxu0 %v796
    %v874 = vpop.f32.mrf.mxu0
    %v875 = vadd.f32 %v815, %v874
    %v876 = vpop.f32.mrf.mxu0
    %877 = vdwg.mxu0
    %878 = vmax.xlane.f32.xlu0 %v875
    %v879 = vpop.xlane.xlu0 %878
    %v880 = vsub.f32 %v875, %v879
    %v881 = vmul.f32 %v880, 1.442695
    %v882 = vpow.pop %v881
    %883 = vadd.xlane.f32.xlu0 %v882
    %v884 = vpop.xlane.xlu0 %883
    %v885 = vlog2.pop %v884
    %v886 = vmul.f32 %v885, 0.6931472
    %v887 = vsub.f32 %v880, %v886
    %vm888 = vcmask 80896
    %889 = vst.msk [vmem:[#allocation11] sm:$0xff] %vm888, %v887
    // Predicated region
    $region58: #{tpu_custom_call.1} parent=1 // pred_check
      _
    $region59: #{tpu_custom_call.1} parent=1 // pred_check_branch
      %891 = sbr.rel (0) target = $region61
    $region60: #{tpu_custom_call.1} parent=1 // pred_region
      %893 = vsyncadd [#allocation4], 0
      %s895 = sshll.u32 [#allocation11], 4
      %s896 = int_to_ptr.vmem [resolvable:$true] %s895
      %s897 = sshll.u32 %s9, 4
      %s898 = int_to_ptr.hbm [resolvable:$true] %s897
      %900 = dma.vmem_to_hbm [thread:$0]  %s896, 128, %s898, [#allocation4]
    $region61: #{tpu_custom_call.1} parent=1 // pred_fallthru
      _
    // Predicated region
    $region62: #{tpu_custom_call.1} parent=1 // pred_check
      _
    $region63: #{tpu_custom_call.1} parent=1 // pred_check_branch
      %902 = sbr.rel (0) target = $region65
    $region64: #{tpu_custom_call.1} parent=1 // pred_region
      %904 = dma.done [#allocation4], 128
    $region65: #{tpu_custom_call.1} parent=1 // pred_fallthru
      _
    %905 = vsyncpa [#allocation3], 1
    %906 = vsyncpa [#allocation6], 1
    %907 = vsyncpa [#allocation9], 1
    %908 = vsyncpa [#allocation4], 1

</llo_original>
